<compile_context>
chip_gen: v5e
topology: v5e:2x2
jax: 0.10.0
libtpu: 0.0.40
codegen_flags: <defaults>
</compile_context>

<pallas_src>
import functools

import jax
import jax.numpy as jnp
from jax.experimental import pallas as pl
from jax.experimental.pallas import tpu as pltpu

_VMEM_LIMIT = 32 * 1024 * 1024  # safe on v5e/v6e/v7x; raises v5e's 16 MiB default


# ----------------------------- Pallas kernels ------------------------------ #

def _conv_pool_bn_kernel(p00_ref, p01_ref, p10_ref, p11_ref, w_ref, b_ref,
                         g_ref, beta_ref, o_ref, *, eps, inv_m):
    """Fused conv (as matmul) + bias + 2x2 maxpool + ReLU + BatchNorm.

    p** : (K, M) im2col matrices, one per pool phase (K = Cin*k*k, M = N*Hp*Wp)
    w   : (Cout, K);  b/g/beta : (Cout, 1);  o : (Cout, M)  -- M lane-dense.
    """
    w = w_ref[...]
    y = jnp.dot(w, p00_ref[...], preferred_element_type=jnp.float32)
    y = jnp.maximum(y, jnp.dot(w, p01_ref[...], preferred_element_type=jnp.float32))
    y = jnp.maximum(y, jnp.dot(w, p10_ref[...], preferred_element_type=jnp.float32))
    y = jnp.maximum(y, jnp.dot(w, p11_ref[...], preferred_element_type=jnp.float32))
    # max-pool commutes with the per-channel bias add, so add bias after the max
    y = jnp.maximum(y + b_ref[...], 0.0)                       # pool -> bias -> relu
    # single-pass per-channel batch statistics (biased variance, PyTorch BN train)
    mean = jnp.sum(y, axis=1, keepdims=True) * inv_m
    var = jnp.sum(y * y, axis=1, keepdims=True) * inv_m - mean * mean
    var = jnp.maximum(var, 0.0)
    o_ref[...] = ((y - mean) * jax.lax.rsqrt(var + eps) * g_ref[...]
                  + beta_ref[...]).astype(o_ref.dtype)


def _fc_head_kernel(x_ref, w1_ref, b1_ref, w2_ref, b2_ref, o_ref):
    """Fused fc1 + ReLU + fc2 + log_softmax, lane-dense over the batch axis.

    x : (320, tn)  w1 : (50, 320)  w2 : (10, 50)  o : (10, tn)
    """
    h = jnp.dot(w1_ref[...], x_ref[...], preferred_element_type=jnp.float32) + b1_ref[...]
    h = jnp.maximum(h, 0.0)
    z = jnp.dot(w2_ref[...], h, preferred_element_type=jnp.float32) + b2_ref[...]
    m = jnp.max(z, axis=0, keepdims=True)
    lse = jnp.log(jnp.sum(jnp.exp(z - m), axis=0, keepdims=True)) + m
    o_ref[...] = (z - lse).astype(o_ref.dtype)


# ----------------------------- Pallas wrappers ----------------------------- #

def conv_pool_relu_bn(patches, w, b, gamma, beta, *, eps=1e-5):
    """patches: list of 4 (K, M) arrays (one per 2x2 pool phase).
    w: (Cout, K), b/gamma/beta: (Cout, 1). Returns (Cout, M) float32."""
    K, M = patches[0].shape
    cout = w.shape[0]
    kernel = functools.partial(_conv_pool_bn_kernel, eps=eps, inv_m=1.0 / M)
    # BN needs full-batch statistics, so M stays a single block here; all other
    # fusion / layout gains come from doing pool+relu+BN in the matmul epilogue.
    return pl.pallas_call(
        kernel,
        out_shape=jax.ShapeDtypeStruct((cout, M), jnp.float32),
        grid=(1,),
        in_specs=[pl.BlockSpec((K, M), lambda i: (0, 0))] * 4
                 + [pl.BlockSpec((cout, K), lambda i: (0, 0)),
                    pl.BlockSpec((cout, 1), lambda i: (0, 0)),
                    pl.BlockSpec((cout, 1), lambda i: (0, 0)),
                    pl.BlockSpec((cout, 1), lambda i: (0, 0))],
        out_specs=pl.BlockSpec((cout, M), lambda i: (0, 0)),
        compiler_params=pltpu.CompilerParams(
            dimension_semantics=("arbitrary",),
            vmem_limit_bytes=_VMEM_LIMIT),
    )(*patches, w, b, gamma, beta)


def _lane_tile(n):
    """Largest of 512/256/128 that divides n, else the full extent."""
    for t in (512, 256, 128):
        if n % t == 0:
            return t
    return n


def fc_head(xt, w1, b1, w2, b2):
    """xt: (320, N) lane-dense flattened activations. Returns (10, N)."""
    K, n = xt.shape
    H = w1.shape[0]
    C = w2.shape[0]
    tn = _lane_tile(n)
    return pl.pallas_call(
        _fc_head_kernel,
        out_shape=jax.ShapeDtypeStruct((C, n), jnp.float32),
        grid=(n // tn,),
        in_specs=[pl.BlockSpec((K, tn), lambda i: (0, i)),
                  pl.BlockSpec((H, K), lambda i: (0, 0)),
                  pl.BlockSpec((H, 1), lambda i: (0, 0)),
                  pl.BlockSpec((C, H), lambda i: (0, 0)),
                  pl.BlockSpec((C, 1), lambda i: (0, 0))],
        out_specs=pl.BlockSpec((C, tn), lambda i: (0, i)),
        compiler_params=pltpu.CompilerParams(
            dimension_semantics=("parallel",),
            vmem_limit_bytes=_VMEM_LIMIT),
    )(xt, w1, b1, w2, b2)


# ------------------------------- JAX glue ---------------------------------- #

def pooled_conv_patches(x_cnhw, k):
    """x: (Cin, N, H, W) -> ([4 x (Cin*k*k, N*Hp*Wp)], (Hp, Wp)).

    Patch matrix for pool phase (s0, s1) of the 2x2 window holds the im2col
    columns of the stride-2-subsampled VALID conv output, so
    conv -> maxpool2x2 becomes max_s (W @ patches[s]) inside the kernel.
    Row order is cin*k*k + kh*k + kw, matching the (Cout, Cin*k*k) weights.
    """
    C, N, H, W = x_cnhw.shape
    Hp, Wp = (H - k + 1) // 2, (W - k + 1) // 2
    mats = []
    for s0 in range(2):
        for s1 in range(2):
            taps = []
            for di in range(k):
                for dj in range(k):
                    t = jax.lax.slice(
                        x_cnhw,
                        (0, 0, s0 + di, s1 + dj),
                        (C, N, s0 + di + 2 * Hp - 1, s1 + dj + 2 * Wp - 1),
                        (1, 1, 2, 2))                      # (C, N, Hp, Wp)
                    taps.append(t)
            p = jnp.stack(taps, axis=1)                    # (C, k*k, N, Hp, Wp)
            mats.append(p.reshape(C * k * k, N * Hp * Wp))
    return mats, (Hp, Wp)


def net_forward(x, params):
    """x: (N, 1, 28, 28) float32 -> log-probabilities (N, 10)."""
    N = x.shape[0]

    # ---- layer 1: conv1(1->10, k=5) + maxpool2 + relu + bn1, one fused kernel
    x_c = jnp.transpose(x, (1, 0, 2, 3))                        # (1, N, 28, 28)
    p1, (h1, w1) = pooled_conv_patches(x_c, 5)                  # 4 x (25, N*144)
    x1 = conv_pool_relu_bn(p1, params["conv1_w"], params["conv1_b"],
                           params["bn1_g"], params["bn1_b"])    # (10, N*144)

    # ---- layer 2: conv2(10->20, k=5) + maxpool2 + relu + bn2, one fused kernel
    x1 = x1.reshape(10, N, h1, w1)                              # (10, N, 12, 12)
    p2, (h2, w2) = pooled_conv_patches(x1, 5)                   # 4 x (250, N*16)
    x2 = conv_pool_relu_bn(p2, params["conv2_w"], params["conv2_b"],
                           params["bn2_g"], params["bn2_b"])    # (20, N*16)

    # ---- head: fc1 + relu + fc2 + log_softmax, fused, lane-dense over batch
    # PyTorch x.view(-1, 320) flattens each sample as (c, h, w) -> build (320, N)
    xt = x2.reshape(20, N, h2 * w2).transpose(0, 2, 1).reshape(320, N)
    logp_t = fc_head(xt, params["fc1_w"], params["fc1_b"],
                     params["fc2_w"], params["fc2_b"])          # (10, N)
    return logp_t.T                                             # (N, 10)


def init_params(key):
    """Parameters stored in kernel-ready layouts (pre-reshaped/pre-transposed)."""
    ks = jax.random.split(key, 8)
    s = 0.1
    f32 = jnp.float32
    return {
        # conv weights as (Cout, Cin*k*k); biases as (Cout, 1)
        "conv1_w": s * jax.random.normal(ks[0], (10, 1 * 5 * 5), f32),
        "conv1_b": s * jax.random.normal(ks[1], (10, 1), f32),
        "conv2_w": s * jax.random.normal(ks[2], (20, 10 * 5 * 5), f32),
        "conv2_b": s * jax.random.normal(ks[3], (20, 1), f32),
        # PyTorch Linear weights are (out, in) already -> kernel-ready
        "fc1_w": s * jax.random.normal(ks[4], (50, 320), f32),
        "fc1_b": s * jax.random.normal(ks[5], (50, 1), f32),
        "fc2_w": s * jax.random.normal(ks[6], (10, 50), f32),
        "fc2_b": s * jax.random.normal(ks[7], (10, 1), f32),
        # BatchNorm affine params, PyTorch default init (gamma=1, beta=0)
        "bn1_g": jnp.ones((10, 1), f32), "bn1_b": jnp.zeros((10, 1), f32),
        "bn2_g": jnp.ones((20, 1), f32), "bn2_b": jnp.zeros((20, 1), f32),
    }


def reference_forward(x, params):
    """Pure-JAX/XLA reference with identical semantics (for cross-checking)."""
    eps = 1e-5

    def conv(x, w2d, b, cin, k):
        w = w2d.reshape(w2d.shape[0], cin, k, k)
        y = jax.lax.conv_general_dilated(
            x, w, (1, 1), "VALID", dimension_numbers=("NCHW", "OIHW", "NCHW"))
        return y + b.reshape(1, -1, 1, 1)

    def pool_relu_bn(y, g, bt):
        p = jax.lax.reduce_window(y, -jnp.inf, jax.lax.max,
                                  (1, 1, 2, 2), (1, 1, 2, 2), "VALID")
        r = jnp.maximum(p, 0.0)
        mean = r.mean(axis=(0, 2, 3), keepdims=True)
        var = ((r - mean) ** 2).mean(axis=(0, 2, 3), keepdims=True)
        return ((r - mean) * jax.lax.rsqrt(var + eps) * g.reshape(1, -1, 1, 1)
                + bt.reshape(1, -1, 1, 1))

    x1 = pool_relu_bn(conv(x, params["conv1_w"], params["conv1_b"], 1, 5),
                      params["bn1_g"], params["bn1_b"])
    x2 = pool_relu_bn(conv(x1, params["conv2_w"], params["conv2_b"], 10, 5),
                      params["bn2_g"], params["bn2_b"])
    flat = x2.reshape(x.shape[0], 320)
    h = jnp.maximum(flat @ params["fc1_w"].T + params["fc1_b"].T, 0.0)
    z = h @ params["fc2_w"].T + params["fc2_b"].T
    return jax.nn.log_softmax(z, axis=-1)


if __name__ == "__main__":
    key = jax.random.PRNGKey(0)
    pkey, xkey = jax.random.split(key)
    params = init_params(pkey)
    x = jax.random.normal(xkey, (4, 1, 28, 28), jnp.float32)   # NCHW, MNIST-sized

    out = jax.block_until_ready(jax.jit(net_forward)(x, params))
    assert out.shape == (4, 10)
    # log_softmax rows must exponentiate-sum to ~1
    assert bool(jnp.all(jnp.abs(jnp.sum(jnp.exp(out), axis=-1) - 1.0) < 1e-4))
    # cross-check against the pure-JAX/XLA reference (loose tol: both paths use
    # the TPU's default reduced-precision f32 matmul passes)
    ref = jax.block_until_ready(jax.jit(reference_forward)(x, params))
    assert bool(jnp.max(jnp.abs(out - ref)) < 0.1), "mismatch vs XLA reference"
    print("KERNEL_OK")
</pallas_src>

<mosaic_0001>
module attributes {stable_mosaic.version = 11 : i64} {
  func.func @_conv_pool_bn_kernel(%arg0: i32, %arg1: memref<25x576xf32, #tpu.memory_space<vmem>>, %arg2: memref<25x576xf32, #tpu.memory_space<vmem>>, %arg3: memref<25x576xf32, #tpu.memory_space<vmem>>, %arg4: memref<25x576xf32, #tpu.memory_space<vmem>>, %arg5: memref<10x25xf32, #tpu.memory_space<vmem>>, %arg6: memref<10x1xf32, #tpu.memory_space<vmem>>, %arg7: memref<10x1xf32, #tpu.memory_space<vmem>>, %arg8: memref<10x1xf32, #tpu.memory_space<vmem>>, %arg9: memref<10x576xf32, #tpu.memory_space<vmem>>) attributes {dimension_semantics = [#tpu.dimension_semantics<arbitrary>], iteration_bounds = array<i64: 1>, scalar_prefetch = 0 : i64, scratch_operands = 0 : i64, tpu.core_type = #tpu.core_type<tc>, window_params = [{pipeline_mode = #tpu.pipeline_mode<synchronous>, transform_indices = @transform_0, window_bounds = array<i64: 25, 576>}, {pipeline_mode = #tpu.pipeline_mode<synchronous>, transform_indices = @transform_1, window_bounds = array<i64: 25, 576>}, {pipeline_mode = #tpu.pipeline_mode<synchronous>, transform_indices = @transform_2, window_bounds = array<i64: 25, 576>}, {pipeline_mode = #tpu.pipeline_mode<synchronous>, transform_indices = @transform_3, window_bounds = array<i64: 25, 576>}, {pipeline_mode = #tpu.pipeline_mode<synchronous>, transform_indices = @transform_4, window_bounds = array<i64: 10, 25>}, {pipeline_mode = #tpu.pipeline_mode<synchronous>, transform_indices = @transform_5, window_bounds = array<i64: 10, 1>}, {pipeline_mode = #tpu.pipeline_mode<synchronous>, transform_indices = @transform_6, window_bounds = array<i64: 10, 1>}, {pipeline_mode = #tpu.pipeline_mode<synchronous>, transform_indices = @transform_7, window_bounds = array<i64: 10, 1>}, {pipeline_mode = #tpu.pipeline_mode<synchronous>, transform_indices = @transform_8, window_bounds = array<i64: 10, 576>}]} {
    %c0 = arith.constant 0 : index
    %c0_0 = arith.constant 0 : index
    %0 = vector.load %arg5[%c0, %c0_0] : memref<10x25xf32, #tpu.memory_space<vmem>>, vector<10x25xf32>
    %c0_1 = arith.constant 0 : index
    %c0_2 = arith.constant 0 : index
    %1 = vector.load %arg1[%c0_1, %c0_2] : memref<25x576xf32, #tpu.memory_space<vmem>>, vector<25x576xf32>
    %cst = arith.constant dense<0.000000e+00> : vector<10x576xf32>
    %2 = tpu.matmul %0, %1, %cst {dimension_numbers = #tpu.dot_dimension_numbers<[1], [0], [0], [1], [0, 0, 1, 1], [], []>} : vector<10x25xf32>, vector<25x576xf32>, vector<10x576xf32> -> vector<10x576xf32>
    %c0_3 = arith.constant 0 : index
    %c0_4 = arith.constant 0 : index
    %3 = vector.load %arg2[%c0_3, %c0_4] : memref<25x576xf32, #tpu.memory_space<vmem>>, vector<25x576xf32>
    %cst_5 = arith.constant dense<0.000000e+00> : vector<10x576xf32>
    %4 = tpu.matmul %0, %3, %cst_5 {dimension_numbers = #tpu.dot_dimension_numbers<[1], [0], [0], [1], [0, 0, 1, 1], [], []>} : vector<10x25xf32>, vector<25x576xf32>, vector<10x576xf32> -> vector<10x576xf32>
    %5 = arith.maximumf %2, %4 : vector<10x576xf32>
    %c0_6 = arith.constant 0 : index
    %c0_7 = arith.constant 0 : index
    %6 = vector.load %arg3[%c0_6, %c0_7] : memref<25x576xf32, #tpu.memory_space<vmem>>, vector<25x576xf32>
    %cst_8 = arith.constant dense<0.000000e+00> : vector<10x576xf32>
    %7 = tpu.matmul %0, %6, %cst_8 {dimension_numbers = #tpu.dot_dimension_numbers<[1], [0], [0], [1], [0, 0, 1, 1], [], []>} : vector<10x25xf32>, vector<25x576xf32>, vector<10x576xf32> -> vector<10x576xf32>
    %8 = arith.maximumf %5, %7 : vector<10x576xf32>
    %c0_9 = arith.constant 0 : index
    %c0_10 = arith.constant 0 : index
    %9 = vector.load %arg4[%c0_9, %c0_10] : memref<25x576xf32, #tpu.memory_space<vmem>>, vector<25x576xf32>
    %cst_11 = arith.constant dense<0.000000e+00> : vector<10x576xf32>
    %10 = tpu.matmul %0, %9, %cst_11 {dimension_numbers = #tpu.dot_dimension_numbers<[1], [0], [0], [1], [0, 0, 1, 1], [], []>} : vector<10x25xf32>, vector<25x576xf32>, vector<10x576xf32> -> vector<10x576xf32>
    %11 = arith.maximumf %8, %10 : vector<10x576xf32>
    %c0_12 = arith.constant 0 : index
    %c0_13 = arith.constant 0 : index
    %12 = vector.load %arg6[%c0_12, %c0_13] : memref<10x1xf32, #tpu.memory_space<vmem>>, vector<10x1xf32>
    %13 = vector.broadcast %12 : vector<10x1xf32> to vector<10x576xf32>
    %14 = arith.addf %11, %13 : vector<10x576xf32>
    %cst_14 = arith.constant 0.000000e+00 : f32
    %15 = vector.broadcast %cst_14 : f32 to vector<10x576xf32>
    %16 = arith.maximumf %14, %15 : vector<10x576xf32>
    %cst_15 = arith.constant dense<0.000000e+00> : vector<10xf32>
    %17 = vector.multi_reduction <add>, %16, %cst_15 [1] : vector<10x576xf32> to vector<10xf32>
    %18 = vector.shape_cast %17 : vector<10xf32> to vector<10x1xf32>
    %cst_16 = arith.constant 0.00173611112 : f32
    %19 = vector.broadcast %cst_16 : f32 to vector<10x1xf32>
    %20 = arith.mulf %18, %19 : vector<10x1xf32>
    %21 = arith.mulf %16, %16 : vector<10x576xf32>
    %cst_17 = arith.constant dense<0.000000e+00> : vector<10xf32>
    %22 = vector.multi_reduction <add>, %21, %cst_17 [1] : vector<10x576xf32> to vector<10xf32>
    %23 = vector.shape_cast %22 : vector<10xf32> to vector<10x1xf32>
    %cst_18 = arith.constant 0.00173611112 : f32
    %24 = vector.broadcast %cst_18 : f32 to vector<10x1xf32>
    %25 = arith.mulf %23, %24 : vector<10x1xf32>
    %26 = arith.mulf %20, %20 : vector<10x1xf32>
    %27 = arith.subf %25, %26 : vector<10x1xf32>
    %cst_19 = arith.constant 0.000000e+00 : f32
    %28 = vector.broadcast %cst_19 : f32 to vector<10x1xf32>
    %29 = arith.maximumf %27, %28 : vector<10x1xf32>
    %30 = vector.broadcast %20 : vector<10x1xf32> to vector<10x576xf32>
    %31 = arith.subf %16, %30 : vector<10x576xf32>
    %cst_20 = arith.constant 9.99999974E-6 : f32
    %32 = vector.broadcast %cst_20 : f32 to vector<10x1xf32>
    %33 = arith.addf %29, %32 : vector<10x1xf32>
    %34 = math.rsqrt %33 : vector<10x1xf32>
    %35 = vector.broadcast %34 : vector<10x1xf32> to vector<10x576xf32>
    %36 = arith.mulf %31, %35 : vector<10x576xf32>
    %c0_21 = arith.constant 0 : index
    %c0_22 = arith.constant 0 : index
    %37 = vector.load %arg7[%c0_21, %c0_22] : memref<10x1xf32, #tpu.memory_space<vmem>>, vector<10x1xf32>
    %38 = vector.broadcast %37 : vector<10x1xf32> to vector<10x576xf32>
    %39 = arith.mulf %36, %38 : vector<10x576xf32>
    %c0_23 = arith.constant 0 : index
    %c0_24 = arith.constant 0 : index
    %40 = vector.load %arg8[%c0_23, %c0_24] : memref<10x1xf32, #tpu.memory_space<vmem>>, vector<10x1xf32>
    %41 = vector.broadcast %40 : vector<10x1xf32> to vector<10x576xf32>
    %42 = arith.addf %39, %41 : vector<10x576xf32>
    %c0_25 = arith.constant 0 : index
    %c0_26 = arith.constant 0 : index
    %43 = vector.load %arg9[%c0_25, %c0_26] : memref<10x576xf32, #tpu.memory_space<vmem>>, vector<10x576xf32>
    tpu.vector_store %arg9[%c0_25, %c0_26], %42 {strides = array<i32>} : memref<10x576xf32, #tpu.memory_space<vmem>>, vector<10x576xf32>,
    return
  }
  func.func @transform_0(%arg0: i32) -> (i32, i32) {
    %c0_i32 = arith.constant 0 : i32
    %c0_i32_0 = arith.constant 0 : i32
    %c0_i32_1 = arith.constant 0 : i32
    return %c0_i32, %c0_i32_0 : i32, i32
  }
  func.func @transform_1(%arg0: i32) -> (i32, i32) {
    %c0_i32 = arith.constant 0 : i32
    %c0_i32_0 = arith.constant 0 : i32
    %c0_i32_1 = arith.constant 0 : i32
    return %c0_i32, %c0_i32_0 : i32, i32
  }
  func.func @transform_2(%arg0: i32) -> (i32, i32) {
    %c0_i32 = arith.constant 0 : i32
    %c0_i32_0 = arith.constant 0 : i32
    %c0_i32_1 = arith.constant 0 : i32
    return %c0_i32, %c0_i32_0 : i32, i32
  }
  func.func @transform_3(%arg0: i32) -> (i32, i32) {
    %c0_i32 = arith.constant 0 : i32
    %c0_i32_0 = arith.constant 0 : i32
    %c0_i32_1 = arith.constant 0 : i32
    return %c0_i32, %c0_i32_0 : i32, i32
  }
  func.func @transform_4(%arg0: i32) -> (i32, i32) {
    %c0_i32 = arith.constant 0 : i32
    %c0_i32_0 = arith.constant 0 : i32
    %c0_i32_1 = arith.constant 0 : i32
    return %c0_i32, %c0_i32_0 : i32, i32
  }
  func.func @transform_5(%arg0: i32) -> (i32, i32) {
    %c0_i32 = arith.constant 0 : i32
    %c0_i32_0 = arith.constant 0 : i32
    %c0_i32_1 = arith.constant 0 : i32
    return %c0_i32, %c0_i32_0 : i32, i32
  }
  func.func @transform_6(%arg0: i32) -> (i32, i32) {
    %c0_i32 = arith.constant 0 : i32
    %c0_i32_0 = arith.constant 0 : i32
    %c0_i32_1 = arith.constant 0 : i32
    return %c0_i32, %c0_i32_0 : i32, i32
  }
  func.func @transform_7(%arg0: i32) -> (i32, i32) {
    %c0_i32 = arith.constant 0 : i32
    %c0_i32_0 = arith.constant 0 : i32
    %c0_i32_1 = arith.constant 0 : i32
    return %c0_i32, %c0_i32_0 : i32, i32
  }
  func.func @transform_8(%arg0: i32) -> (i32, i32) {
    %c0_i32 = arith.constant 0 : i32
    %c0_i32_0 = arith.constant 0 : i32
    %c0_i32_1 = arith.constant 0 : i32
    return %c0_i32, %c0_i32_0 : i32, i32
  }
}

module attributes {stable_mosaic.version = 11 : i64} {
  func.func @_conv_pool_bn_kernel(%arg0: i32, %arg1: memref<250x64xf32, #tpu.memory_space<vmem>>, %arg2: memref<250x64xf32, #tpu.memory_space<vmem>>, %arg3: memref<250x64xf32, #tpu.memory_space<vmem>>, %arg4: memref<250x64xf32, #tpu.memory_space<vmem>>, %arg5: memref<20x250xf32, #tpu.memory_space<vmem>>, %arg6: memref<20x1xf32, #tpu.memory_space<vmem>>, %arg7: memref<20x1xf32, #tpu.memory_space<vmem>>, %arg8: memref<20x1xf32, #tpu.memory_space<vmem>>, %arg9: memref<20x64xf32, #tpu.memory_space<vmem>>) attributes {dimension_semantics = [#tpu.dimension_semantics<arbitrary>], iteration_bounds = array<i64: 1>, scalar_prefetch = 0 : i64, scratch_operands = 0 : i64, tpu.core_type = #tpu.core_type<tc>, window_params = [{pipeline_mode = #tpu.pipeline_mode<synchronous>, transform_indices = @transform_0, window_bounds = array<i64: 250, 64>}, {pipeline_mode = #tpu.pipeline_mode<synchronous>, transform_indices = @transform_1, window_bounds = array<i64: 250, 64>}, {pipeline_mode = #tpu.pipeline_mode<synchronous>, transform_indices = @transform_2, window_bounds = array<i64: 250, 64>}, {pipeline_mode = #tpu.pipeline_mode<synchronous>, transform_indices = @transform_3, window_bounds = array<i64: 250, 64>}, {pipeline_mode = #tpu.pipeline_mode<synchronous>, transform_indices = @transform_4, window_bounds = array<i64: 20, 250>}, {pipeline_mode = #tpu.pipeline_mode<synchronous>, transform_indices = @transform_5, window_bounds = array<i64: 20, 1>}, {pipeline_mode = #tpu.pipeline_mode<synchronous>, transform_indices = @transform_6, window_bounds = array<i64: 20, 1>}, {pipeline_mode = #tpu.pipeline_mode<synchronous>, transform_indices = @transform_7, window_bounds = array<i64: 20, 1>}, {pipeline_mode = #tpu.pipeline_mode<synchronous>, transform_indices = @transform_8, window_bounds = array<i64: 20, 64>}]} {
    %c0 = arith.constant 0 : index
    %c0_0 = arith.constant 0 : index
    %0 = vector.load %arg5[%c0, %c0_0] : memref<20x250xf32, #tpu.memory_space<vmem>>, vector<20x250xf32>
    %c0_1 = arith.constant 0 : index
    %c0_2 = arith.constant 0 : index
    %1 = vector.load %arg1[%c0_1, %c0_2] : memref<250x64xf32, #tpu.memory_space<vmem>>, vector<250x64xf32>
    %cst = arith.constant dense<0.000000e+00> : vector<20x64xf32>
    %2 = tpu.matmul %0, %1, %cst {dimension_numbers = #tpu.dot_dimension_numbers<[1], [0], [0], [1], [0, 0, 1, 1], [], []>} : vector<20x250xf32>, vector<250x64xf32>, vector<20x64xf32> -> vector<20x64xf32>
    %c0_3 = arith.constant 0 : index
    %c0_4 = arith.constant 0 : index
    %3 = vector.load %arg2[%c0_3, %c0_4] : memref<250x64xf32, #tpu.memory_space<vmem>>, vector<250x64xf32>
    %cst_5 = arith.constant dense<0.000000e+00> : vector<20x64xf32>
    %4 = tpu.matmul %0, %3, %cst_5 {dimension_numbers = #tpu.dot_dimension_numbers<[1], [0], [0], [1], [0, 0, 1, 1], [], []>} : vector<20x250xf32>, vector<250x64xf32>, vector<20x64xf32> -> vector<20x64xf32>
    %5 = arith.maximumf %2, %4 : vector<20x64xf32>
    %c0_6 = arith.constant 0 : index
    %c0_7 = arith.constant 0 : index
    %6 = vector.load %arg3[%c0_6, %c0_7] : memref<250x64xf32, #tpu.memory_space<vmem>>, vector<250x64xf32>
    %cst_8 = arith.constant dense<0.000000e+00> : vector<20x64xf32>
    %7 = tpu.matmul %0, %6, %cst_8 {dimension_numbers = #tpu.dot_dimension_numbers<[1], [0], [0], [1], [0, 0, 1, 1], [], []>} : vector<20x250xf32>, vector<250x64xf32>, vector<20x64xf32> -> vector<20x64xf32>
    %8 = arith.maximumf %5, %7 : vector<20x64xf32>
    %c0_9 = arith.constant 0 : index
    %c0_10 = arith.constant 0 : index
    %9 = vector.load %arg4[%c0_9, %c0_10] : memref<250x64xf32, #tpu.memory_space<vmem>>, vector<250x64xf32>
    %cst_11 = arith.constant dense<0.000000e+00> : vector<20x64xf32>
    %10 = tpu.matmul %0, %9, %cst_11 {dimension_numbers = #tpu.dot_dimension_numbers<[1], [0], [0], [1], [0, 0, 1, 1], [], []>} : vector<20x250xf32>, vector<250x64xf32>, vector<20x64xf32> -> vector<20x64xf32>
    %11 = arith.maximumf %8, %10 : vector<20x64xf32>
    %c0_12 = arith.constant 0 : index
    %c0_13 = arith.constant 0 : index
    %12 = vector.load %arg6[%c0_12, %c0_13] : memref<20x1xf32, #tpu.memory_space<vmem>>, vector<20x1xf32>
    %13 = vector.broadcast %12 : vector<20x1xf32> to vector<20x64xf32>
    %14 = arith.addf %11, %13 : vector<20x64xf32>
    %cst_14 = arith.constant 0.000000e+00 : f32
    %15 = vector.broadcast %cst_14 : f32 to vector<20x64xf32>
    %16 = arith.maximumf %14, %15 : vector<20x64xf32>
    %cst_15 = arith.constant dense<0.000000e+00> : vector<20xf32>
    %17 = vector.multi_reduction <add>, %16, %cst_15 [1] : vector<20x64xf32> to vector<20xf32>
    %18 = vector.shape_cast %17 : vector<20xf32> to vector<20x1xf32>
    %cst_16 = arith.constant 1.562500e-02 : f32
    %19 = vector.broadcast %cst_16 : f32 to vector<20x1xf32>
    %20 = arith.mulf %18, %19 : vector<20x1xf32>
    %21 = arith.mulf %16, %16 : vector<20x64xf32>
    %cst_17 = arith.constant dense<0.000000e+00> : vector<20xf32>
    %22 = vector.multi_reduction <add>, %21, %cst_17 [1] : vector<20x64xf32> to vector<20xf32>
    %23 = vector.shape_cast %22 : vector<20xf32> to vector<20x1xf32>
    %cst_18 = arith.constant 1.562500e-02 : f32
    %24 = vector.broadcast %cst_18 : f32 to vector<20x1xf32>
    %25 = arith.mulf %23, %24 : vector<20x1xf32>
    %26 = arith.mulf %20, %20 : vector<20x1xf32>
    %27 = arith.subf %25, %26 : vector<20x1xf32>
    %cst_19 = arith.constant 0.000000e+00 : f32
    %28 = vector.broadcast %cst_19 : f32 to vector<20x1xf32>
    %29 = arith.maximumf %27, %28 : vector<20x1xf32>
    %30 = vector.broadcast %20 : vector<20x1xf32> to vector<20x64xf32>
    %31 = arith.subf %16, %30 : vector<20x64xf32>
    %cst_20 = arith.constant 9.99999974E-6 : f32
    %32 = vector.broadcast %cst_20 : f32 to vector<20x1xf32>
    %33 = arith.addf %29, %32 : vector<20x1xf32>
    %34 = math.rsqrt %33 : vector<20x1xf32>
    %35 = vector.broadcast %34 : vector<20x1xf32> to vector<20x64xf32>
    %36 = arith.mulf %31, %35 : vector<20x64xf32>
    %c0_21 = arith.constant 0 : index
    %c0_22 = arith.constant 0 : index
    %37 = vector.load %arg7[%c0_21, %c0_22] : memref<20x1xf32, #tpu.memory_space<vmem>>, vector<20x1xf32>
    %38 = vector.broadcast %37 : vector<20x1xf32> to vector<20x64xf32>
    %39 = arith.mulf %36, %38 : vector<20x64xf32>
    %c0_23 = arith.constant 0 : index
    %c0_24 = arith.constant 0 : index
    %40 = vector.load %arg8[%c0_23, %c0_24] : memref<20x1xf32, #tpu.memory_space<vmem>>, vector<20x1xf32>
    %41 = vector.broadcast %40 : vector<20x1xf32> to vector<20x64xf32>
    %42 = arith.addf %39, %41 : vector<20x64xf32>
    %c0_25 = arith.constant 0 : index
    %c0_26 = arith.constant 0 : index
    %43 = vector.load %arg9[%c0_25, %c0_26] : memref<20x64xf32, #tpu.memory_space<vmem>>, vector<20x64xf32>
    tpu.vector_store %arg9[%c0_25, %c0_26], %42 {strides = array<i32>} : memref<20x64xf32, #tpu.memory_space<vmem>>, vector<20x64xf32>,
    return
  }
  func.func @transform_0(%arg0: i32) -> (i32, i32) {
    %c0_i32 = arith.constant 0 : i32
    %c0_i32_0 = arith.constant 0 : i32
    %c0_i32_1 = arith.constant 0 : i32
    return %c0_i32, %c0_i32_0 : i32, i32
  }
  func.func @transform_1(%arg0: i32) -> (i32, i32) {
    %c0_i32 = arith.constant 0 : i32
    %c0_i32_0 = arith.constant 0 : i32
    %c0_i32_1 = arith.constant 0 : i32
    return %c0_i32, %c0_i32_0 : i32, i32
  }
  func.func @transform_2(%arg0: i32) -> (i32, i32) {
    %c0_i32 = arith.constant 0 : i32
    %c0_i32_0 = arith.constant 0 : i32
    %c0_i32_1 = arith.constant 0 : i32
    return %c0_i32, %c0_i32_0 : i32, i32
  }
  func.func @transform_3(%arg0: i32) -> (i32, i32) {
    %c0_i32 = arith.constant 0 : i32
    %c0_i32_0 = arith.constant 0 : i32
    %c0_i32_1 = arith.constant 0 : i32
    return %c0_i32, %c0_i32_0 : i32, i32
  }
  func.func @transform_4(%arg0: i32) -> (i32, i32) {
    %c0_i32 = arith.constant 0 : i32
    %c0_i32_0 = arith.constant 0 : i32
    %c0_i32_1 = arith.constant 0 : i32
    return %c0_i32, %c0_i32_0 : i32, i32
  }
  func.func @transform_5(%arg0: i32) -> (i32, i32) {
    %c0_i32 = arith.constant 0 : i32
    %c0_i32_0 = arith.constant 0 : i32
    %c0_i32_1 = arith.constant 0 : i32
    return %c0_i32, %c0_i32_0 : i32, i32
  }
  func.func @transform_6(%arg0: i32) -> (i32, i32) {
    %c0_i32 = arith.constant 0 : i32
    %c0_i32_0 = arith.constant 0 : i32
    %c0_i32_1 = arith.constant 0 : i32
    return %c0_i32, %c0_i32_0 : i32, i32
  }
  func.func @transform_7(%arg0: i32) -> (i32, i32) {
    %c0_i32 = arith.constant 0 : i32
    %c0_i32_0 = arith.constant 0 : i32
    %c0_i32_1 = arith.constant 0 : i32
    return %c0_i32, %c0_i32_0 : i32, i32
  }
  func.func @transform_8(%arg0: i32) -> (i32, i32) {
    %c0_i32 = arith.constant 0 : i32
    %c0_i32_0 = arith.constant 0 : i32
    %c0_i32_1 = arith.constant 0 : i32
    return %c0_i32, %c0_i32_0 : i32, i32
  }
}

module attributes {stable_mosaic.version = 11 : i64} {
  func.func @_fc_head_kernel(%arg0: i32, %arg1: memref<320x4xf32, #tpu.memory_space<vmem>>, %arg2: memref<50x320xf32, #tpu.memory_space<vmem>>, %arg3: memref<50x1xf32, #tpu.memory_space<vmem>>, %arg4: memref<10x50xf32, #tpu.memory_space<vmem>>, %arg5: memref<10x1xf32, #tpu.memory_space<vmem>>, %arg6: memref<10x4xf32, #tpu.memory_space<vmem>>) attributes {dimension_semantics = [#tpu.dimension_semantics<parallel>], iteration_bounds = array<i64: 1>, scalar_prefetch = 0 : i64, scratch_operands = 0 : i64, tpu.core_type = #tpu.core_type<tc>, window_params = [{transform_indices = @transform_0, window_bounds = array<i64: 320, 4>}, {pipeline_mode = #tpu.pipeline_mode<synchronous>, transform_indices = @transform_1, window_bounds = array<i64: 50, 320>}, {pipeline_mode = #tpu.pipeline_mode<synchronous>, transform_indices = @transform_2, window_bounds = array<i64: 50, 1>}, {pipeline_mode = #tpu.pipeline_mode<synchronous>, transform_indices = @transform_3, window_bounds = array<i64: 10, 50>}, {pipeline_mode = #tpu.pipeline_mode<synchronous>, transform_indices = @transform_4, window_bounds = array<i64: 10, 1>}, {transform_indices = @transform_5, window_bounds = array<i64: 10, 4>}]} {
    %c0 = arith.constant 0 : index
    %c0_0 = arith.constant 0 : index
    %0 = vector.load %arg2[%c0, %c0_0] : memref<50x320xf32, #tpu.memory_space<vmem>>, vector<50x320xf32>
    %c0_1 = arith.constant 0 : index
    %c0_2 = arith.constant 0 : index
    %1 = vector.load %arg1[%c0_1, %c0_2] : memref<320x4xf32, #tpu.memory_space<vmem>>, vector<320x4xf32>
    %cst = arith.constant dense<0.000000e+00> : vector<50x4xf32>
    %2 = tpu.matmul %0, %1, %cst {dimension_numbers = #tpu.dot_dimension_numbers<[1], [0], [0], [1], [0, 0, 1, 1], [], []>} : vector<50x320xf32>, vector<320x4xf32>, vector<50x4xf32> -> vector<50x4xf32>
    %c0_3 = arith.constant 0 : index
    %c0_4 = arith.constant 0 : index
    %3 = vector.load %arg3[%c0_3, %c0_4] : memref<50x1xf32, #tpu.memory_space<vmem>>, vector<50x1xf32>
    %4 = vector.broadcast %3 : vector<50x1xf32> to vector<50x4xf32>
    %5 = arith.addf %2, %4 : vector<50x4xf32>
    %cst_5 = arith.constant 0.000000e+00 : f32
    %6 = vector.broadcast %cst_5 : f32 to vector<50x4xf32>
    %7 = arith.maximumf %5, %6 : vector<50x4xf32>
    %c0_6 = arith.constant 0 : index
    %c0_7 = arith.constant 0 : index
    %8 = vector.load %arg4[%c0_6, %c0_7] : memref<10x50xf32, #tpu.memory_space<vmem>>, vector<10x50xf32>
    %cst_8 = arith.constant dense<0.000000e+00> : vector<10x4xf32>
    %9 = tpu.matmul %8, %7, %cst_8 {dimension_numbers = #tpu.dot_dimension_numbers<[1], [0], [0], [1], [0, 0, 1, 1], [], []>} : vector<10x50xf32>, vector<50x4xf32>, vector<10x4xf32> -> vector<10x4xf32>
    %c0_9 = arith.constant 0 : index
    %c0_10 = arith.constant 0 : index
    %10 = vector.load %arg5[%c0_9, %c0_10] : memref<10x1xf32, #tpu.memory_space<vmem>>, vector<10x1xf32>
    %11 = vector.broadcast %10 : vector<10x1xf32> to vector<10x4xf32>
    %12 = arith.addf %9, %11 : vector<10x4xf32>
    %cst_11 = arith.constant dense<0xFF800000> : vector<4xf32>
    %13 = vector.multi_reduction <maximumf>, %12, %cst_11 [0] : vector<10x4xf32> to vector<4xf32>
    %14 = vector.shape_cast %13 : vector<4xf32> to vector<1x4xf32>
    %15 = vector.broadcast %14 : vector<1x4xf32> to vector<10x4xf32>
    %16 = arith.subf %12, %15 : vector<10x4xf32>
    %17 = math.exp %16 : vector<10x4xf32>
    %cst_12 = arith.constant dense<0.000000e+00> : vector<4xf32>
    %18 = vector.multi_reduction <add>, %17, %cst_12 [0] : vector<10x4xf32> to vector<4xf32>
    %19 = vector.shape_cast %18 : vector<4xf32> to vector<1x4xf32>
    %20 = math.log %19 : vector<1x4xf32>
    %21 = arith.addf %20, %14 : vector<1x4xf32>
    %22 = vector.broadcast %21 : vector<1x4xf32> to vector<10x4xf32>
    %23 = arith.subf %12, %22 : vector<10x4xf32>
    %c0_13 = arith.constant 0 : index
    %c0_14 = arith.constant 0 : index
    %24 = vector.load %arg6[%c0_13, %c0_14] : memref<10x4xf32, #tpu.memory_space<vmem>>, vector<10x4xf32>
    tpu.vector_store %arg6[%c0_13, %c0_14], %23 {strides = array<i32>} : memref<10x4xf32, #tpu.memory_space<vmem>>, vector<10x4xf32>,
    return
  }
  func.func @transform_0(%arg0: i32) -> (i32, i32) {
    %c0_i32 = arith.constant 0 : i32
    %c0_i32_0 = arith.constant 0 : i32
    return %c0_i32, %arg0 : i32, i32
  }
  func.func @transform_1(%arg0: i32) -> (i32, i32) {
    %c0_i32 = arith.constant 0 : i32
    %c0_i32_0 = arith.constant 0 : i32
    %c0_i32_1 = arith.constant 0 : i32
    return %c0_i32, %c0_i32_0 : i32, i32
  }
  func.func @transform_2(%arg0: i32) -> (i32, i32) {
    %c0_i32 = arith.constant 0 : i32
    %c0_i32_0 = arith.constant 0 : i32
    %c0_i32_1 = arith.constant 0 : i32
    return %c0_i32, %c0_i32_0 : i32, i32
  }
  func.func @transform_3(%arg0: i32) -> (i32, i32) {
    %c0_i32 = arith.constant 0 : i32
    %c0_i32_0 = arith.constant 0 : i32
    %c0_i32_1 = arith.constant 0 : i32
    return %c0_i32, %c0_i32_0 : i32, i32
  }
  func.func @transform_4(%arg0: i32) -> (i32, i32) {
    %c0_i32 = arith.constant 0 : i32
    %c0_i32_0 = arith.constant 0 : i32
    %c0_i32_1 = arith.constant 0 : i32
    return %c0_i32, %c0_i32_0 : i32, i32
  }
  func.func @transform_5(%arg0: i32) -> (i32, i32) {
    %c0_i32 = arith.constant 0 : i32
    %c0_i32_0 = arith.constant 0 : i32
    return %c0_i32, %arg0 : i32, i32
  }
}

</mosaic_0001>

<llo_original>
// kernel: net_forward.3
$region0: #{net_forward.3}
  #allocation0 [shape = 'u32[]', space=smem, size = 0x4, offset = 0x4, fixed_abs, tag = 'smem constant byte address 0x4 - core index']
  #allocation1 [shape = 'u32[72,128]{1,0:T(1,128)}', space=vmem, size = 0x9000, scoped, tag = 'internal scratch']
  %s0 = inlined_call_operand.vmem [shape: f32[25,576], index: 0, kind: input, shape index: {}]
  %s1 = inlined_call_operand.vmem [shape: f32[25,576], index: 1, kind: input, shape index: {}]
  %s2 = inlined_call_operand.vmem [shape: f32[25,576], index: 2, kind: input, shape index: {}]
  %s3 = inlined_call_operand.vmem [shape: f32[25,576], index: 3, kind: input, shape index: {}]
  %s4 = inlined_call_operand.vmem [shape: f32[10,25], index: 4, kind: input, shape index: {}]
  %s5 = inlined_call_operand.vmem [shape: f32[10,1], index: 5, kind: input, shape index: {}]
  %s6 = inlined_call_operand.vmem [shape: f32[10,1], index: 6, kind: input, shape index: {}]
  %s7 = inlined_call_operand.vmem [shape: f32[10,1], index: 7, kind: input, shape index: {}]
  %s8 = inlined_call_operand.vmem [shape: f32[10,576], index: 8, kind: output, shape index: {}]
  %s9 = sld [smem:[#allocation0]]
  $region42: #{net_forward.3} parent=0
    _
  %s11 = ssub.s32 1, %s9
  %s12 = scalar_select 0, %s11, %s9
  // Predicated region
  $region2: #{net_forward.3} parent=0 // pred_check
    _
  $region3: #{net_forward.3} parent=0 // pred_check_branch
    %14 = sbr.rel (0) target = $region5
  $region4: #{net_forward.3} parent=0 // pred_region
    _
  $region5: #{net_forward.3} parent=0 // pred_fallthru
    _
  // Predicated region
  $region6: #{net_forward.3} parent=0 // pred_check
    _
  $region7: #{net_forward.3} parent=0 // pred_check_branch
    %16 = sbr.rel (0) target = $region9
  $region8: #{net_forward.3} parent=0 // pred_region
    _
  $region9: #{net_forward.3} parent=0 // pred_fallthru
    _
  // Predicated region
  $region10: #{net_forward.3} parent=0 // pred_check
    _
  $region11: #{net_forward.3} parent=0 // pred_check_branch
    %18 = sbr.rel (0) target = $region13
  $region12: #{net_forward.3} parent=0 // pred_region
    _
  $region13: #{net_forward.3} parent=0 // pred_fallthru
    _
  // Predicated region
  $region14: #{net_forward.3} parent=0 // pred_check
    _
  $region15: #{net_forward.3} parent=0 // pred_check_branch
    %20 = sbr.rel (0) target = $region17
  $region16: #{net_forward.3} parent=0 // pred_region
    _
  $region17: #{net_forward.3} parent=0 // pred_fallthru
    _
  // Predicated region
  $region18: #{net_forward.3} parent=0 // pred_check
    _
  $region19: #{net_forward.3} parent=0 // pred_check_branch
    %22 = sbr.rel (0) target = $region21
  $region20: #{net_forward.3} parent=0 // pred_region
    _
  $region21: #{net_forward.3} parent=0 // pred_fallthru
    _
  // Predicated region
  $region22: #{net_forward.3} parent=0 // pred_check
    _
  $region23: #{net_forward.3} parent=0 // pred_check_branch
    %24 = sbr.rel (0) target = $region25
  $region24: #{net_forward.3} parent=0 // pred_region
    _
  $region25: #{net_forward.3} parent=0 // pred_fallthru
    _
  // Predicated region
  $region26: #{net_forward.3} parent=0 // pred_check
    _
  $region27: #{net_forward.3} parent=0 // pred_check_branch
    %26 = sbr.rel (0) target = $region29
  $region28: #{net_forward.3} parent=0 // pred_region
    _
  $region29: #{net_forward.3} parent=0 // pred_fallthru
    _
  // Predicated region
  $region30: #{net_forward.3} parent=0 // pred_check
    _
  $region31: #{net_forward.3} parent=0 // pred_check_branch
    %28 = sbr.rel (0) target = $region33
  $region32: #{net_forward.3} parent=0 // pred_region
    _
  $region33: #{net_forward.3} parent=0 // pred_fallthru
    _
  %v29 = vld [vmem:[%s4] sm:$0xff]
  %v30 = vld [vmem:[%s4 + $0x8] sm:$0x3]
  %v31 = vld [vmem:[%s0] sm:$0xff]
  %v32 = vld [vmem:[%s0 + $0x8] sm:$0xff]
  %v33 = vld [vmem:[%s0 + $0x10] sm:$0xff]
  %v34 = vld [vmem:[%s0 + $0x18] sm:$0xff]
  %v35 = vld [vmem:[%s0 + $0x20] sm:$0xff]
  %v36 = vld [vmem:[%s0 + $0x28] sm:$0xff]
  %v37 = vld [vmem:[%s0 + $0x30] sm:$0xff]
  %v38 = vld [vmem:[%s0 + $0x38] sm:$0xff]
  %v39 = vld [vmem:[%s0 + $0x40] sm:$0xff]
  %v40 = vld [vmem:[%s0 + $0x48] sm:$0xff]
  %v41 = vld [vmem:[%s0 + $0x50] sm:$0xff]
  %v42 = vld [vmem:[%s0 + $0x58] sm:$0xff]
  %v43 = vld [vmem:[%s0 + $0x60] sm:$0xff]
  %v44 = vld [vmem:[%s0 + $0x68] sm:$0xff]
  %v45 = vld [vmem:[%s0 + $0x70] sm:$0xff]
  %v46 = vld [vmem:[%s0 + $0x78] sm:$0x1]
  %v47 = vld [vmem:[%s0 + $0x80] sm:$0x1]
  %v48 = vld [vmem:[%s0 + $0x88] sm:$0x1]
  %v49 = vld [vmem:[%s0 + $0x90] sm:$0x1]
  %v50 = vld [vmem:[%s0 + $0x98] sm:$0x1]
  %vm51 = vcmask 203776
  %v53 = vsel %vm51, %v29, 0
  %v56 = vsel %vm51, %v30, 0
  %vm58 = vcmask 1040384
  %v60 = vsel %vm58, %v46, 0
  %v63 = vsel %vm58, %v47, 0
  %v66 = vsel %vm58, %v48, 0
  %v69 = vsel %vm58, %v49, 0
  %v72 = vsel %vm58, %v50, 0
  %74 = vmatpush.msra.mxu0 0.0
  %75 = vmatpush.msra.mxu0 0.0
  %76 = vmatpush.msra.mxu0 0.0
  %77 = vmatpush.msra.mxu0 0.0
  %78 = vmatpush.msra.mxu0 0.0
  %79 = vmatpush.msra.mxu0 0.0
  %80 = vmatpush.msra.mxu0 0.0
  %81 = vmatpush.msra.mxu0 0.0
  %82 = vmatpush.msra.mxu0 0.0
  %83 = vmatpush.msra.mxu0 0.0
  %84 = vmatpush.msra.mxu0 0.0
  %85 = vmatpush.msra.mxu0 0.0
  %86 = vmatpush.msra.mxu0 %v60
  %87 = vmatpush.msra.mxu0 %v41
  %88 = vmatpush.msra.mxu0 %v36
  %89 = vmatpush.msra.mxu0 %v31
  %90 = vmatmul.f32.gmra.mxu0 %v53
  %v91 = vpop.f32.mrf.mxu0
  %v92 = vadd.f32 0.0, %v91
  %93 = vmatmul.f32.gmra.mxu0 %v56
  %v94 = vpop.f32.mrf.mxu0
  %v95 = vadd.f32 0.0, %v94
  %96 = vdwg.mxu0
  %97 = vmatpush.msra.mxu0 0.0
  %98 = vmatpush.msra.mxu0 0.0
  %99 = vmatpush.msra.mxu0 0.0
  %100 = vmatpush.msra.mxu0 0.0
  %101 = vmatpush.msra.mxu0 0.0
  %102 = vmatpush.msra.mxu0 0.0
  %103 = vmatpush.msra.mxu0 0.0
  %104 = vmatpush.msra.mxu0 0.0
  %105 = vmatpush.msra.mxu0 0.0
  %106 = vmatpush.msra.mxu0 0.0
  %107 = vmatpush.msra.mxu0 0.0
  %108 = vmatpush.msra.mxu0 0.0
  %109 = vmatpush.msra.mxu0 %v63
  %110 = vmatpush.msra.mxu0 %v42
  %111 = vmatpush.msra.mxu0 %v37
  %112 = vmatpush.msra.mxu0 %v32
  %113 = vmatmul.f32.gmra.mxu0 %v53
  %v114 = vpop.f32.mrf.mxu0
  %v115 = vadd.f32 0.0, %v114
  %116 = vmatmul.f32.gmra.mxu0 %v56
  %v117 = vpop.f32.mrf.mxu0
  %v118 = vadd.f32 0.0, %v117
  %119 = vdwg.mxu0
  %120 = vmatpush.msra.mxu0 0.0
  %121 = vmatpush.msra.mxu0 0.0
  %122 = vmatpush.msra.mxu0 0.0
  %123 = vmatpush.msra.mxu0 0.0
  %124 = vmatpush.msra.mxu0 0.0
  %125 = vmatpush.msra.mxu0 0.0
  %126 = vmatpush.msra.mxu0 0.0
  %127 = vmatpush.msra.mxu0 0.0
  %128 = vmatpush.msra.mxu0 0.0
  %129 = vmatpush.msra.mxu0 0.0
  %130 = vmatpush.msra.mxu0 0.0
  %131 = vmatpush.msra.mxu0 0.0
  %132 = vmatpush.msra.mxu0 %v66
  %133 = vmatpush.msra.mxu0 %v43
  %134 = vmatpush.msra.mxu0 %v38
  %135 = vmatpush.msra.mxu0 %v33
  %136 = vmatmul.f32.gmra.mxu0 %v53
  %v137 = vpop.f32.mrf.mxu0
  %v138 = vadd.f32 0.0, %v137
  %139 = vmatmul.f32.gmra.mxu0 %v56
  %v140 = vpop.f32.mrf.mxu0
  %v141 = vadd.f32 0.0, %v140
  %142 = vdwg.mxu0
  %143 = vmatpush.msra.mxu0 0.0
  %144 = vmatpush.msra.mxu0 0.0
  %145 = vmatpush.msra.mxu0 0.0
  %146 = vmatpush.msra.mxu0 0.0
  %147 = vmatpush.msra.mxu0 0.0
  %148 = vmatpush.msra.mxu0 0.0
  %149 = vmatpush.msra.mxu0 0.0
  %150 = vmatpush.msra.mxu0 0.0
  %151 = vmatpush.msra.mxu0 0.0
  %152 = vmatpush.msra.mxu0 0.0
  %153 = vmatpush.msra.mxu0 0.0
  %154 = vmatpush.msra.mxu0 0.0
  %155 = vmatpush.msra.mxu0 %v69
  %156 = vmatpush.msra.mxu0 %v44
  %157 = vmatpush.msra.mxu0 %v39
  %158 = vmatpush.msra.mxu0 %v34
  %159 = vmatmul.f32.gmra.mxu0 %v53
  %v160 = vpop.f32.mrf.mxu0
  %v161 = vadd.f32 0.0, %v160
  %162 = vmatmul.f32.gmra.mxu0 %v56
  %v163 = vpop.f32.mrf.mxu0
  %v164 = vadd.f32 0.0, %v163
  %165 = vdwg.mxu0
  %166 = vmatpush.msra.mxu0 0.0
  %167 = vmatpush.msra.mxu0 0.0
  %168 = vmatpush.msra.mxu0 0.0
  %169 = vmatpush.msra.mxu0 0.0
  %170 = vmatpush.msra.mxu0 0.0
  %171 = vmatpush.msra.mxu0 0.0
  %172 = vmatpush.msra.mxu0 0.0
  %173 = vmatpush.msra.mxu0 0.0
  %174 = vmatpush.msra.mxu0 0.0
  %175 = vmatpush.msra.mxu0 0.0
  %176 = vmatpush.msra.mxu0 0.0
  %177 = vmatpush.msra.mxu0 0.0
  %178 = vmatpush.msra.mxu0 %v72
  %179 = vmatpush.msra.mxu0 %v45
  %180 = vmatpush.msra.mxu0 %v40
  %181 = vmatpush.msra.mxu0 %v35
  %182 = vmatmul.f32.gmra.mxu0 %v53
  %v183 = vpop.f32.mrf.mxu0
  %v184 = vadd.f32 0.0, %v183
  %185 = vmatmul.f32.gmra.mxu0 %v56
  %v186 = vpop.f32.mrf.mxu0
  %v187 = vadd.f32 0.0, %v186
  %188 = vdwg.mxu0
  %v189 = vld [vmem:[%s1] sm:$0xff]
  %v190 = vld [vmem:[%s1 + $0x8] sm:$0xff]
  %v191 = vld [vmem:[%s1 + $0x10] sm:$0xff]
  %v192 = vld [vmem:[%s1 + $0x18] sm:$0xff]
  %v193 = vld [vmem:[%s1 + $0x20] sm:$0xff]
  %v194 = vld [vmem:[%s1 + $0x28] sm:$0xff]
  %v195 = vld [vmem:[%s1 + $0x30] sm:$0xff]
  %v196 = vld [vmem:[%s1 + $0x38] sm:$0xff]
  %v197 = vld [vmem:[%s1 + $0x40] sm:$0xff]
  %v198 = vld [vmem:[%s1 + $0x48] sm:$0xff]
  %v199 = vld [vmem:[%s1 + $0x50] sm:$0xff]
  %v200 = vld [vmem:[%s1 + $0x58] sm:$0xff]
  %v201 = vld [vmem:[%s1 + $0x60] sm:$0xff]
  %v202 = vld [vmem:[%s1 + $0x68] sm:$0xff]
  %v203 = vld [vmem:[%s1 + $0x70] sm:$0xff]
  %v204 = vld [vmem:[%s1 + $0x78] sm:$0x1]
  %v205 = vld [vmem:[%s1 + $0x80] sm:$0x1]
  %v206 = vld [vmem:[%s1 + $0x88] sm:$0x1]
  %v207 = vld [vmem:[%s1 + $0x90] sm:$0x1]
  %v208 = vld [vmem:[%s1 + $0x98] sm:$0x1]
  %v210 = vsel %vm58, %v204, 0
  %v213 = vsel %vm58, %v205, 0
  %v216 = vsel %vm58, %v206, 0
  %v219 = vsel %vm58, %v207, 0
  %v222 = vsel %vm58, %v208, 0
  %224 = vmatpush.msra.mxu0 0.0
  %225 = vmatpush.msra.mxu0 0.0
  %226 = vmatpush.msra.mxu0 0.0
  %227 = vmatpush.msra.mxu0 0.0
  %228 = vmatpush.msra.mxu0 0.0
  %229 = vmatpush.msra.mxu0 0.0
  %230 = vmatpush.msra.mxu0 0.0
  %231 = vmatpush.msra.mxu0 0.0
  %232 = vmatpush.msra.mxu0 0.0
  %233 = vmatpush.msra.mxu0 0.0
  %234 = vmatpush.msra.mxu0 0.0
  %235 = vmatpush.msra.mxu0 0.0
  %236 = vmatpush.msra.mxu0 %v210
  %237 = vmatpush.msra.mxu0 %v199
  %238 = vmatpush.msra.mxu0 %v194
  %239 = vmatpush.msra.mxu0 %v189
  %240 = vmatmul.f32.gmra.mxu0 %v53
  %v241 = vpop.f32.mrf.mxu0
  %v242 = vadd.f32 0.0, %v241
  %243 = vmatmul.f32.gmra.mxu0 %v56
  %v244 = vpop.f32.mrf.mxu0
  %v245 = vadd.f32 0.0, %v244
  %246 = vdwg.mxu0
  %247 = vmatpush.msra.mxu0 0.0
  %248 = vmatpush.msra.mxu0 0.0
  %249 = vmatpush.msra.mxu0 0.0
  %250 = vmatpush.msra.mxu0 0.0
  %251 = vmatpush.msra.mxu0 0.0
  %252 = vmatpush.msra.mxu0 0.0
  %253 = vmatpush.msra.mxu0 0.0
  %254 = vmatpush.msra.mxu0 0.0
  %255 = vmatpush.msra.mxu0 0.0
  %256 = vmatpush.msra.mxu0 0.0
  %257 = vmatpush.msra.mxu0 0.0
  %258 = vmatpush.msra.mxu0 0.0
  %259 = vmatpush.msra.mxu0 %v213
  %260 = vmatpush.msra.mxu0 %v200
  %261 = vmatpush.msra.mxu0 %v195
  %262 = vmatpush.msra.mxu0 %v190
  %263 = vmatmul.f32.gmra.mxu0 %v53
  %v264 = vpop.f32.mrf.mxu0
  %v265 = vadd.f32 0.0, %v264
  %266 = vmatmul.f32.gmra.mxu0 %v56
  %v267 = vpop.f32.mrf.mxu0
  %v268 = vadd.f32 0.0, %v267
  %269 = vdwg.mxu0
  %270 = vmatpush.msra.mxu0 0.0
  %271 = vmatpush.msra.mxu0 0.0
  %272 = vmatpush.msra.mxu0 0.0
  %273 = vmatpush.msra.mxu0 0.0
  %274 = vmatpush.msra.mxu0 0.0
  %275 = vmatpush.msra.mxu0 0.0
  %276 = vmatpush.msra.mxu0 0.0
  %277 = vmatpush.msra.mxu0 0.0
  %278 = vmatpush.msra.mxu0 0.0
  %279 = vmatpush.msra.mxu0 0.0
  %280 = vmatpush.msra.mxu0 0.0
  %281 = vmatpush.msra.mxu0 0.0
  %282 = vmatpush.msra.mxu0 %v216
  %283 = vmatpush.msra.mxu0 %v201
  %284 = vmatpush.msra.mxu0 %v196
  %285 = vmatpush.msra.mxu0 %v191
  %286 = vmatmul.f32.gmra.mxu0 %v53
  %v287 = vpop.f32.mrf.mxu0
  %v288 = vadd.f32 0.0, %v287
  %289 = vmatmul.f32.gmra.mxu0 %v56
  %v290 = vpop.f32.mrf.mxu0
  %v291 = vadd.f32 0.0, %v290
  %292 = vdwg.mxu0
  %293 = vmatpush.msra.mxu0 0.0
  %294 = vmatpush.msra.mxu0 0.0
  %295 = vmatpush.msra.mxu0 0.0
  %296 = vmatpush.msra.mxu0 0.0
  %297 = vmatpush.msra.mxu0 0.0
  %298 = vmatpush.msra.mxu0 0.0
  %299 = vmatpush.msra.mxu0 0.0
  %300 = vmatpush.msra.mxu0 0.0
  %301 = vmatpush.msra.mxu0 0.0
  %302 = vmatpush.msra.mxu0 0.0
  %303 = vmatpush.msra.mxu0 0.0
  %304 = vmatpush.msra.mxu0 0.0
  %305 = vmatpush.msra.mxu0 %v219
  %306 = vmatpush.msra.mxu0 %v202
  %307 = vmatpush.msra.mxu0 %v197
  %308 = vmatpush.msra.mxu0 %v192
  %309 = vmatmul.f32.gmra.mxu0 %v53
  %v310 = vpop.f32.mrf.mxu0
  %v311 = vadd.f32 0.0, %v310
  %312 = vmatmul.f32.gmra.mxu0 %v56
  %v313 = vpop.f32.mrf.mxu0
  %v314 = vadd.f32 0.0, %v313
  %315 = vdwg.mxu0
  %316 = vmatpush.msra.mxu0 0.0
  %317 = vmatpush.msra.mxu0 0.0
  %318 = vmatpush.msra.mxu0 0.0
  %319 = vmatpush.msra.mxu0 0.0
  %320 = vmatpush.msra.mxu0 0.0
  %321 = vmatpush.msra.mxu0 0.0
  %322 = vmatpush.msra.mxu0 0.0
  %323 = vmatpush.msra.mxu0 0.0
  %324 = vmatpush.msra.mxu0 0.0
  %325 = vmatpush.msra.mxu0 0.0
  %326 = vmatpush.msra.mxu0 0.0
  %327 = vmatpush.msra.mxu0 0.0
  %328 = vmatpush.msra.mxu0 %v222
  %329 = vmatpush.msra.mxu0 %v203
  %330 = vmatpush.msra.mxu0 %v198
  %331 = vmatpush.msra.mxu0 %v193
  %332 = vmatmul.f32.gmra.mxu0 %v53
  %v333 = vpop.f32.mrf.mxu0
  %v334 = vadd.f32 0.0, %v333
  %335 = vmatmul.f32.gmra.mxu0 %v56
  %v336 = vpop.f32.mrf.mxu0
  %v337 = vadd.f32 0.0, %v336
  %338 = vdwg.mxu0
  %v339 = vmax.f32 %v92, %v242
  %v340 = vmax.f32 %v115, %v265
  %v341 = vmax.f32 %v138, %v288
  %v342 = vmax.f32 %v161, %v311
  %v343 = vmax.f32 %v184, %v334
  %v344 = vmax.f32 %v95, %v245
  %v345 = vmax.f32 %v118, %v268
  %v346 = vmax.f32 %v141, %v291
  %v347 = vmax.f32 %v164, %v314
  %v348 = vmax.f32 %v187, %v337
  %v349 = vld [vmem:[%s2] sm:$0xff]
  %v350 = vld [vmem:[%s2 + $0x8] sm:$0xff]
  %v351 = vld [vmem:[%s2 + $0x10] sm:$0xff]
  %v352 = vld [vmem:[%s2 + $0x18] sm:$0xff]
  %v353 = vld [vmem:[%s2 + $0x20] sm:$0xff]
  %v354 = vld [vmem:[%s2 + $0x28] sm:$0xff]
  %v355 = vld [vmem:[%s2 + $0x30] sm:$0xff]
  %v356 = vld [vmem:[%s2 + $0x38] sm:$0xff]
  %v357 = vld [vmem:[%s2 + $0x40] sm:$0xff]
  %v358 = vld [vmem:[%s2 + $0x48] sm:$0xff]
  %v359 = vld [vmem:[%s2 + $0x50] sm:$0xff]
  %v360 = vld [vmem:[%s2 + $0x58] sm:$0xff]
  %v361 = vld [vmem:[%s2 + $0x60] sm:$0xff]
  %v362 = vld [vmem:[%s2 + $0x68] sm:$0xff]
  %v363 = vld [vmem:[%s2 + $0x70] sm:$0xff]
  %v364 = vld [vmem:[%s2 + $0x78] sm:$0x1]
  %v365 = vld [vmem:[%s2 + $0x80] sm:$0x1]
  %v366 = vld [vmem:[%s2 + $0x88] sm:$0x1]
  %v367 = vld [vmem:[%s2 + $0x90] sm:$0x1]
  %v368 = vld [vmem:[%s2 + $0x98] sm:$0x1]
  %v370 = vsel %vm58, %v364, 0
  %v373 = vsel %vm58, %v365, 0
  %v376 = vsel %vm58, %v366, 0
  %v379 = vsel %vm58, %v367, 0
  %v382 = vsel %vm58, %v368, 0
  %384 = vmatpush.msra.mxu0 0.0
  %385 = vmatpush.msra.mxu0 0.0
  %386 = vmatpush.msra.mxu0 0.0
  %387 = vmatpush.msra.mxu0 0.0
  %388 = vmatpush.msra.mxu0 0.0
  %389 = vmatpush.msra.mxu0 0.0
  %390 = vmatpush.msra.mxu0 0.0
  %391 = vmatpush.msra.mxu0 0.0
  %392 = vmatpush.msra.mxu0 0.0
  %393 = vmatpush.msra.mxu0 0.0
  %394 = vmatpush.msra.mxu0 0.0
  %395 = vmatpush.msra.mxu0 0.0
  %396 = vmatpush.msra.mxu0 %v370
  %397 = vmatpush.msra.mxu0 %v359
  %398 = vmatpush.msra.mxu0 %v354
  %399 = vmatpush.msra.mxu0 %v349
  %400 = vmatmul.f32.gmra.mxu0 %v53
  %v401 = vpop.f32.mrf.mxu0
  %v402 = vadd.f32 0.0, %v401
  %403 = vmatmul.f32.gmra.mxu0 %v56
  %v404 = vpop.f32.mrf.mxu0
  %v405 = vadd.f32 0.0, %v404
  %406 = vdwg.mxu0
  %407 = vmatpush.msra.mxu0 0.0
  %408 = vmatpush.msra.mxu0 0.0
  %409 = vmatpush.msra.mxu0 0.0
  %410 = vmatpush.msra.mxu0 0.0
  %411 = vmatpush.msra.mxu0 0.0
  %412 = vmatpush.msra.mxu0 0.0
  %413 = vmatpush.msra.mxu0 0.0
  %414 = vmatpush.msra.mxu0 0.0
  %415 = vmatpush.msra.mxu0 0.0
  %416 = vmatpush.msra.mxu0 0.0
  %417 = vmatpush.msra.mxu0 0.0
  %418 = vmatpush.msra.mxu0 0.0
  %419 = vmatpush.msra.mxu0 %v373
  %420 = vmatpush.msra.mxu0 %v360
  %421 = vmatpush.msra.mxu0 %v355
  %422 = vmatpush.msra.mxu0 %v350
  %423 = vmatmul.f32.gmra.mxu0 %v53
  %v424 = vpop.f32.mrf.mxu0
  %v425 = vadd.f32 0.0, %v424
  %426 = vmatmul.f32.gmra.mxu0 %v56
  %v427 = vpop.f32.mrf.mxu0
  %v428 = vadd.f32 0.0, %v427
  %429 = vdwg.mxu0
  %430 = vmatpush.msra.mxu0 0.0
  %431 = vmatpush.msra.mxu0 0.0
  %432 = vmatpush.msra.mxu0 0.0
  %433 = vmatpush.msra.mxu0 0.0
  %434 = vmatpush.msra.mxu0 0.0
  %435 = vmatpush.msra.mxu0 0.0
  %436 = vmatpush.msra.mxu0 0.0
  %437 = vmatpush.msra.mxu0 0.0
  %438 = vmatpush.msra.mxu0 0.0
  %439 = vmatpush.msra.mxu0 0.0
  %440 = vmatpush.msra.mxu0 0.0
  %441 = vmatpush.msra.mxu0 0.0
  %442 = vmatpush.msra.mxu0 %v376
  %443 = vmatpush.msra.mxu0 %v361
  %444 = vmatpush.msra.mxu0 %v356
  %445 = vmatpush.msra.mxu0 %v351
  %446 = vmatmul.f32.gmra.mxu0 %v53
  %v447 = vpop.f32.mrf.mxu0
  %v448 = vadd.f32 0.0, %v447
  %449 = vmatmul.f32.gmra.mxu0 %v56
  %v450 = vpop.f32.mrf.mxu0
  %v451 = vadd.f32 0.0, %v450
  %452 = vdwg.mxu0
  %453 = vmatpush.msra.mxu0 0.0
  %454 = vmatpush.msra.mxu0 0.0
  %455 = vmatpush.msra.mxu0 0.0
  %456 = vmatpush.msra.mxu0 0.0
  %457 = vmatpush.msra.mxu0 0.0
  %458 = vmatpush.msra.mxu0 0.0
  %459 = vmatpush.msra.mxu0 0.0
  %460 = vmatpush.msra.mxu0 0.0
  %461 = vmatpush.msra.mxu0 0.0
  %462 = vmatpush.msra.mxu0 0.0
  %463 = vmatpush.msra.mxu0 0.0
  %464 = vmatpush.msra.mxu0 0.0
  %465 = vmatpush.msra.mxu0 %v379
  %466 = vmatpush.msra.mxu0 %v362
  %467 = vmatpush.msra.mxu0 %v357
  %468 = vmatpush.msra.mxu0 %v352
  %469 = vmatmul.f32.gmra.mxu0 %v53
  %v470 = vpop.f32.mrf.mxu0
  %v471 = vadd.f32 0.0, %v470
  %472 = vmatmul.f32.gmra.mxu0 %v56
  %v473 = vpop.f32.mrf.mxu0
  %v474 = vadd.f32 0.0, %v473
  %475 = vdwg.mxu0
  %476 = vmatpush.msra.mxu0 0.0
  %477 = vmatpush.msra.mxu0 0.0
  %478 = vmatpush.msra.mxu0 0.0
  %479 = vmatpush.msra.mxu0 0.0
  %480 = vmatpush.msra.mxu0 0.0
  %481 = vmatpush.msra.mxu0 0.0
  %482 = vmatpush.msra.mxu0 0.0
  %483 = vmatpush.msra.mxu0 0.0
  %484 = vmatpush.msra.mxu0 0.0
  %485 = vmatpush.msra.mxu0 0.0
  %486 = vmatpush.msra.mxu0 0.0
  %487 = vmatpush.msra.mxu0 0.0
  %488 = vmatpush.msra.mxu0 %v382
  %489 = vmatpush.msra.mxu0 %v363
  %490 = vmatpush.msra.mxu0 %v358
  %491 = vmatpush.msra.mxu0 %v353
  %492 = vmatmul.f32.gmra.mxu0 %v53
  %v493 = vpop.f32.mrf.mxu0
  %v494 = vadd.f32 0.0, %v493
  %495 = vmatmul.f32.gmra.mxu0 %v56
  %v496 = vpop.f32.mrf.mxu0
  %v497 = vadd.f32 0.0, %v496
  %498 = vdwg.mxu0
  %v499 = vmax.f32 %v339, %v402
  %v500 = vmax.f32 %v340, %v425
  %v501 = vmax.f32 %v341, %v448
  %v502 = vmax.f32 %v342, %v471
  %v503 = vmax.f32 %v343, %v494
  %v504 = vmax.f32 %v344, %v405
  %v505 = vmax.f32 %v345, %v428
  %v506 = vmax.f32 %v346, %v451
  %v507 = vmax.f32 %v347, %v474
  %v508 = vmax.f32 %v348, %v497
  %v509 = vld [vmem:[%s3] sm:$0xff]
  %v510 = vld [vmem:[%s3 + $0x8] sm:$0xff]
  %v511 = vld [vmem:[%s3 + $0x10] sm:$0xff]
  %v512 = vld [vmem:[%s3 + $0x18] sm:$0xff]
  %v513 = vld [vmem:[%s3 + $0x20] sm:$0xff]
  %v514 = vld [vmem:[%s3 + $0x28] sm:$0xff]
  %v515 = vld [vmem:[%s3 + $0x30] sm:$0xff]
  %v516 = vld [vmem:[%s3 + $0x38] sm:$0xff]
  %v517 = vld [vmem:[%s3 + $0x40] sm:$0xff]
  %v518 = vld [vmem:[%s3 + $0x48] sm:$0xff]
  %v519 = vld [vmem:[%s3 + $0x50] sm:$0xff]
  %v520 = vld [vmem:[%s3 + $0x58] sm:$0xff]
  %v521 = vld [vmem:[%s3 + $0x60] sm:$0xff]
  %v522 = vld [vmem:[%s3 + $0x68] sm:$0xff]
  %v523 = vld [vmem:[%s3 + $0x70] sm:$0xff]
  %v524 = vld [vmem:[%s3 + $0x78] sm:$0x1]
  %v525 = vld [vmem:[%s3 + $0x80] sm:$0x1]
  %v526 = vld [vmem:[%s3 + $0x88] sm:$0x1]
  %v527 = vld [vmem:[%s3 + $0x90] sm:$0x1]
  %v528 = vld [vmem:[%s3 + $0x98] sm:$0x1]
  %v530 = vsel %vm58, %v524, 0
  %v533 = vsel %vm58, %v525, 0
  %v536 = vsel %vm58, %v526, 0
  %v539 = vsel %vm58, %v527, 0
  %v542 = vsel %vm58, %v528, 0
  %544 = vmatpush.msra.mxu0 0.0
  %545 = vmatpush.msra.mxu0 0.0
  %546 = vmatpush.msra.mxu0 0.0
  %547 = vmatpush.msra.mxu0 0.0
  %548 = vmatpush.msra.mxu0 0.0
  %549 = vmatpush.msra.mxu0 0.0
  %550 = vmatpush.msra.mxu0 0.0
  %551 = vmatpush.msra.mxu0 0.0
  %552 = vmatpush.msra.mxu0 0.0
  %553 = vmatpush.msra.mxu0 0.0
  %554 = vmatpush.msra.mxu0 0.0
  %555 = vmatpush.msra.mxu0 0.0
  %556 = vmatpush.msra.mxu0 %v530
  %557 = vmatpush.msra.mxu0 %v519
  %558 = vmatpush.msra.mxu0 %v514
  %559 = vmatpush.msra.mxu0 %v509
  %560 = vmatmul.f32.gmra.mxu0 %v53
  %v561 = vpop.f32.mrf.mxu0
  %v562 = vadd.f32 0.0, %v561
  %563 = vmatmul.f32.gmra.mxu0 %v56
  %v564 = vpop.f32.mrf.mxu0
  %v565 = vadd.f32 0.0, %v564
  %566 = vdwg.mxu0
  %567 = vmatpush.msra.mxu0 0.0
  %568 = vmatpush.msra.mxu0 0.0
  %569 = vmatpush.msra.mxu0 0.0
  %570 = vmatpush.msra.mxu0 0.0
  %571 = vmatpush.msra.mxu0 0.0
  %572 = vmatpush.msra.mxu0 0.0
  %573 = vmatpush.msra.mxu0 0.0
  %574 = vmatpush.msra.mxu0 0.0
  %575 = vmatpush.msra.mxu0 0.0
  %576 = vmatpush.msra.mxu0 0.0
  %577 = vmatpush.msra.mxu0 0.0
  %578 = vmatpush.msra.mxu0 0.0
  %579 = vmatpush.msra.mxu0 %v533
  %580 = vmatpush.msra.mxu0 %v520
  %581 = vmatpush.msra.mxu0 %v515
  %582 = vmatpush.msra.mxu0 %v510
  %583 = vmatmul.f32.gmra.mxu0 %v53
  %v584 = vpop.f32.mrf.mxu0
  %v585 = vadd.f32 0.0, %v584
  %586 = vmatmul.f32.gmra.mxu0 %v56
  %v587 = vpop.f32.mrf.mxu0
  %v588 = vadd.f32 0.0, %v587
  %589 = vdwg.mxu0
  %590 = vmatpush.msra.mxu0 0.0
  %591 = vmatpush.msra.mxu0 0.0
  %592 = vmatpush.msra.mxu0 0.0
  %593 = vmatpush.msra.mxu0 0.0
  %594 = vmatpush.msra.mxu0 0.0
  %595 = vmatpush.msra.mxu0 0.0
  %596 = vmatpush.msra.mxu0 0.0
  %597 = vmatpush.msra.mxu0 0.0
  %598 = vmatpush.msra.mxu0 0.0
  %599 = vmatpush.msra.mxu0 0.0
  %600 = vmatpush.msra.mxu0 0.0
  %601 = vmatpush.msra.mxu0 0.0
  %602 = vmatpush.msra.mxu0 %v536
  %603 = vmatpush.msra.mxu0 %v521
  %604 = vmatpush.msra.mxu0 %v516
  %605 = vmatpush.msra.mxu0 %v511
  %606 = vmatmul.f32.gmra.mxu0 %v53
  %v607 = vpop.f32.mrf.mxu0
  %v608 = vadd.f32 0.0, %v607
  %609 = vmatmul.f32.gmra.mxu0 %v56
  %v610 = vpop.f32.mrf.mxu0
  %v611 = vadd.f32 0.0, %v610
  %612 = vdwg.mxu0
  %613 = vmatpush.msra.mxu0 0.0
  %614 = vmatpush.msra.mxu0 0.0
  %615 = vmatpush.msra.mxu0 0.0
  %616 = vmatpush.msra.mxu0 0.0
  %617 = vmatpush.msra.mxu0 0.0
  %618 = vmatpush.msra.mxu0 0.0
  %619 = vmatpush.msra.mxu0 0.0
  %620 = vmatpush.msra.mxu0 0.0
  %621 = vmatpush.msra.mxu0 0.0
  %622 = vmatpush.msra.mxu0 0.0
  %623 = vmatpush.msra.mxu0 0.0
  %624 = vmatpush.msra.mxu0 0.0
  %625 = vmatpush.msra.mxu0 %v539
  %626 = vmatpush.msra.mxu0 %v522
  %627 = vmatpush.msra.mxu0 %v517
  %628 = vmatpush.msra.mxu0 %v512
  %629 = vmatmul.f32.gmra.mxu0 %v53
  %v630 = vpop.f32.mrf.mxu0
  %v631 = vadd.f32 0.0, %v630
  %632 = vmatmul.f32.gmra.mxu0 %v56
  %v633 = vpop.f32.mrf.mxu0
  %v634 = vadd.f32 0.0, %v633
  %635 = vdwg.mxu0
  %636 = vmatpush.msra.mxu0 0.0
  %637 = vmatpush.msra.mxu0 0.0
  %638 = vmatpush.msra.mxu0 0.0
  %639 = vmatpush.msra.mxu0 0.0
  %640 = vmatpush.msra.mxu0 0.0
  %641 = vmatpush.msra.mxu0 0.0
  %642 = vmatpush.msra.mxu0 0.0
  %643 = vmatpush.msra.mxu0 0.0
  %644 = vmatpush.msra.mxu0 0.0
  %645 = vmatpush.msra.mxu0 0.0
  %646 = vmatpush.msra.mxu0 0.0
  %647 = vmatpush.msra.mxu0 0.0
  %648 = vmatpush.msra.mxu0 %v542
  %649 = vmatpush.msra.mxu0 %v523
  %650 = vmatpush.msra.mxu0 %v518
  %651 = vmatpush.msra.mxu0 %v513
  %652 = vmatmul.f32.gmra.mxu0 %v53
  %v653 = vpop.f32.mrf.mxu0
  %v654 = vadd.f32 0.0, %v653
  %655 = vmatmul.f32.gmra.mxu0 %v56
  %v656 = vpop.f32.mrf.mxu0
  %v657 = vadd.f32 0.0, %v656
  %658 = vdwg.mxu0
  %v659 = vmax.f32 %v499, %v562
  %v660 = vmax.f32 %v500, %v585
  %v661 = vmax.f32 %v501, %v608
  %v662 = vmax.f32 %v502, %v631
  %v663 = vmax.f32 %v503, %v654
  %v664 = vmax.f32 %v504, %v565
  %v665 = vmax.f32 %v505, %v588
  %v666 = vmax.f32 %v506, %v611
  %v667 = vmax.f32 %v507, %v634
  %v668 = vmax.f32 %v508, %v657
  %v669 = vld [vmem:[%s5] sm:$0xff]
  %v670 = vld [vmem:[%s5 + $0x8] sm:$0x3]
  %672 = vset.pattern.permute.xlu0 0
  %673 = vperm.xlu0 %672, %v669
  %v674 = vpop.permute.xlu0 %673
  %677 = vset.pattern.permute.xlu0 0
  %678 = vperm.xlu0 %677, %v670
  %v679 = vpop.permute.xlu0 %678
  %v681 = vadd.f32 %v659, %v674
  %v682 = vadd.f32 %v660, %v674
  %v683 = vadd.f32 %v661, %v674
  %v684 = vadd.f32 %v662, %v674
  %v685 = vadd.f32 %v663, %v674
  %v686 = vadd.f32 %v664, %v679
  %v687 = vadd.f32 %v665, %v679
  %v688 = vadd.f32 %v666, %v679
  %v689 = vadd.f32 %v667, %v679
  %v690 = vadd.f32 %v668, %v679
  %v691 = vmax.f32 %v681, 0.0
  %v692 = vmax.f32 %v682, 0.0
  %v693 = vmax.f32 %v683, 0.0
  %v694 = vmax.f32 %v684, 0.0
  %v695 = vmax.f32 %v685, 0.0
  %v696 = vmax.f32 %v686, 0.0
  %v697 = vmax.f32 %v687, 0.0
  %v698 = vmax.f32 %v688, 0.0
  %v699 = vmax.f32 %v689, 0.0
  %v700 = vmax.f32 %v690, 0.0
  %v701 = vadd.f32 %v691, %v692
  %v702 = vadd.f32 %v701, %v693
  %v703 = vadd.f32 %v702, %v694
  %vm704 = vcmask 523264
  %v705 = vsel %vm704, %v695, 0.0
  %v706 = vadd.f32 %v703, %v705
  %707 = vadd.xlane.f32.xlu0 %v706
  %v708 = vpop.xlane.xlu0 %707
  %vm709 = vcmask 1041408
  %v710 = vsel %vm709, %v696, 0.0
  %v711 = vsel %vm709, %v697, 0.0
  %v712 = vadd.f32 %v710, %v711
  %v713 = vsel %vm709, %v698, 0.0
  %v714 = vadd.f32 %v712, %v713
  %v715 = vsel %vm709, %v699, 0.0
  %v716 = vadd.f32 %v714, %v715
  %vm717 = vcmask 517120
  %v718 = vsel %vm717, %v700, 0.0
  %v719 = vadd.f32 %v716, %v718
  %720 = vadd.xlane.f32.xlu0 %v719
  %v721 = vpop.xlane.xlu0 %720
  %v722 = vmul.f32 %v708, 0.0017361111
  %v723 = vmul.f32 %v721, 0.0017361111
  %v724 = vmul.f32 %v691, %v691
  %v725 = vmul.f32 %v692, %v692
  %v726 = vmul.f32 %v693, %v693
  %v727 = vmul.f32 %v694, %v694
  %v728 = vmul.f32 %v695, %v695
  %v729 = vmul.f32 %v696, %v696
  %v730 = vmul.f32 %v697, %v697
  %v731 = vmul.f32 %v698, %v698
  %v732 = vmul.f32 %v699, %v699
  %v733 = vmul.f32 %v700, %v700
  %v734 = vadd.f32 %v724, %v725
  %v735 = vadd.f32 %v734, %v726
  %v736 = vadd.f32 %v735, %v727
  %v737 = vsel %vm704, %v728, 0.0
  %v738 = vadd.f32 %v736, %v737
  %739 = vadd.xlane.f32.xlu0 %v738
  %v740 = vpop.xlane.xlu0 %739
  %v741 = vsel %vm709, %v729, 0.0
  %v742 = vsel %vm709, %v730, 0.0
  %v743 = vadd.f32 %v741, %v742
  %v744 = vsel %vm709, %v731, 0.0
  %v745 = vadd.f32 %v743, %v744
  %v746 = vsel %vm709, %v732, 0.0
  %v747 = vadd.f32 %v745, %v746
  %v748 = vsel %vm717, %v733, 0.0
  %v749 = vadd.f32 %v747, %v748
  %750 = vadd.xlane.f32.xlu0 %v749
  %v751 = vpop.xlane.xlu0 %750
  %v752 = vmul.f32 %v740, 0.0017361111
  %v753 = vmul.f32 %v751, 0.0017361111
  %v754 = vmul.f32 %v722, %v722
  %v755 = vmul.f32 %v723, %v723
  %v756 = vsub.f32 %v752, %v754
  %v757 = vsub.f32 %v753, %v755
  %v758 = vmax.f32 %v756, 0.0
  %v759 = vmax.f32 %v757, 0.0
  %v760 = vsub.f32 %v691, %v722
  %v761 = vsub.f32 %v692, %v722
  %v762 = vsub.f32 %v693, %v722
  %v763 = vsub.f32 %v694, %v722
  %v764 = vsub.f32 %v695, %v722
  %v765 = vsub.f32 %v696, %v723
  %v766 = vsub.f32 %v697, %v723
  %v767 = vsub.f32 %v698, %v723
  %v768 = vsub.f32 %v699, %v723
  %v769 = vsub.f32 %v700, %v723
  %v770 = vadd.f32 %v758, 1e-05
  %v771 = vadd.f32 %v759, 1e-05
  %v772 = vrsqrt.pop %v770
  %v773 = vmul.f32 %v772, %v770
  %v774 = vmul.f32 %v773, %v772
  %v775 = vmul.f32 0.5, %v774
  %v776 = vsub.f32 1.5, %v775
  %v777 = vmul.f32 %v772, %v776
  %vm778 = vweird.f32 %v770
  %vm779 = vweird.f32 %v772
  %vm780 = vmor %vm778, %vm779
  %v781 = vsel %vm780, %v772, %v777
  %v782 = vrsqrt.pop %v771
  %v783 = vmul.f32 %v782, %v771
  %v784 = vmul.f32 %v783, %v782
  %v785 = vmul.f32 0.5, %v784
  %v786 = vsub.f32 1.5, %v785
  %v787 = vmul.f32 %v782, %v786
  %vm788 = vweird.f32 %v771
  %vm789 = vweird.f32 %v782
  %vm790 = vmor %vm788, %vm789
  %v791 = vsel %vm790, %v782, %v787
  %v792 = vmul.f32 %v760, %v781
  %v793 = vmul.f32 %v761, %v781
  %v794 = vmul.f32 %v762, %v781
  %v795 = vmul.f32 %v763, %v781
  %v796 = vmul.f32 %v764, %v781
  %v797 = vmul.f32 %v765, %v791
  %v798 = vmul.f32 %v766, %v791
  %v799 = vmul.f32 %v767, %v791
  %v800 = vmul.f32 %v768, %v791
  %v801 = vmul.f32 %v769, %v791
  %v802 = vld [vmem:[%s6] sm:$0xff]
  %v803 = vld [vmem:[%s6 + $0x8] sm:$0x3]
  %805 = vset.pattern.permute.xlu0 0
  %806 = vperm.xlu0 %805, %v802
  %v807 = vpop.permute.xlu0 %806
  %810 = vset.pattern.permute.xlu0 0
  %811 = vperm.xlu0 %810, %v803
  %v812 = vpop.permute.xlu0 %811
  %v814 = vmul.f32 %v792, %v807
  %v815 = vmul.f32 %v793, %v807
  %v816 = vmul.f32 %v794, %v807
  %v817 = vmul.f32 %v795, %v807
  %v818 = vmul.f32 %v796, %v807
  %v819 = vmul.f32 %v797, %v812
  %v820 = vmul.f32 %v798, %v812
  %v821 = vmul.f32 %v799, %v812
  %v822 = vmul.f32 %v800, %v812
  %v823 = vmul.f32 %v801, %v812
  %v824 = vld [vmem:[%s7] sm:$0xff]
  %v825 = vld [vmem:[%s7 + $0x8] sm:$0x3]
  %827 = vset.pattern.permute.xlu0 0
  %828 = vperm.xlu0 %827, %v824
  %v829 = vpop.permute.xlu0 %828
  %832 = vset.pattern.permute.xlu0 0
  %833 = vperm.xlu0 %832, %v825
  %v834 = vpop.permute.xlu0 %833
  %v836 = vadd.f32 %v814, %v829
  %v837 = vadd.f32 %v815, %v829
  %v838 = vadd.f32 %v816, %v829
  %v839 = vadd.f32 %v817, %v829
  %v840 = vadd.f32 %v818, %v829
  %v841 = vadd.f32 %v819, %v834
  %v842 = vadd.f32 %v820, %v834
  %v843 = vadd.f32 %v821, %v834
  %v844 = vadd.f32 %v822, %v834
  %v845 = vadd.f32 %v823, %v834
  %846 = vst [vmem:[%s8] sm:$0xff] %v836
  %847 = vst [vmem:[%s8 + $0x8] sm:$0xff] %v837
  %848 = vst [vmem:[%s8 + $0x10] sm:$0xff] %v838
  %849 = vst [vmem:[%s8 + $0x18] sm:$0xff] %v839
  %850 = vst.msk [vmem:[%s8 + $0x20] sm:$0xff] %vm704, %v840
  %851 = vst [vmem:[%s8 + $0x28] sm:$0x3] %v841
  %852 = vst [vmem:[%s8 + $0x30] sm:$0x3] %v842
  %853 = vst [vmem:[%s8 + $0x38] sm:$0x3] %v843
  %854 = vst [vmem:[%s8 + $0x40] sm:$0x3] %v844
  %855 = vst.msk [vmem:[%s8 + $0x48] sm:$0x3] %vm717, %v845
  // Predicated region
  $region34: #{net_forward.3} parent=0 // pred_check
    _
  $region35: #{net_forward.3} parent=0 // pred_check_branch
    %857 = sbr.rel (0) target = $region37
  $region36: #{net_forward.3} parent=0 // pred_region
    _
  $region37: #{net_forward.3} parent=0 // pred_fallthru
    _
  // Predicated region
  $region38: #{net_forward.3} parent=0 // pred_check
    _
  $region39: #{net_forward.3} parent=0 // pred_check_branch
    %859 = sbr.rel (0) target = $region41
  $region40: #{net_forward.3} parent=0 // pred_region
    _
  $region41: #{net_forward.3} parent=0 // pred_fallthru
    _

// kernel: net_forward.4
$region0: #{net_forward.4}
  #allocation0 [shape = 'u32[]', space=smem, size = 0x4, offset = 0x4, fixed_abs, tag = 'smem constant byte address 0x4 - core index']
  #allocation1 [shape = 'u32[72,128]{1,0:T(1,128)}', space=vmem, size = 0x9000, scoped, tag = 'internal scratch']
  %s0 = inlined_call_operand.vmem [shape: f32[250,64], index: 0, kind: input, shape index: {}]
  %s1 = inlined_call_operand.vmem [shape: f32[250,64], index: 1, kind: input, shape index: {}]
  %s2 = inlined_call_operand.vmem [shape: f32[250,64], index: 2, kind: input, shape index: {}]
  %s3 = inlined_call_operand.vmem [shape: f32[250,64], index: 3, kind: input, shape index: {}]
  %s4 = inlined_call_operand.vmem [shape: f32[20,250], index: 4, kind: input, shape index: {}]
  %s5 = inlined_call_operand.vmem [shape: f32[20,1], index: 5, kind: input, shape index: {}]
  %s6 = inlined_call_operand.vmem [shape: f32[20,1], index: 6, kind: input, shape index: {}]
  %s7 = inlined_call_operand.vmem [shape: f32[20,1], index: 7, kind: input, shape index: {}]
  %s8 = inlined_call_operand.vmem [shape: f32[20,64], index: 8, kind: output, shape index: {}]
  %s9 = sld [smem:[#allocation0]]
  $region42: #{net_forward.4} parent=0
    _
  %s11 = ssub.s32 1, %s9
  %s12 = scalar_select 0, %s11, %s9
  // Predicated region
  $region2: #{net_forward.4} parent=0 // pred_check
    _
  $region3: #{net_forward.4} parent=0 // pred_check_branch
    %14 = sbr.rel (0) target = $region5
  $region4: #{net_forward.4} parent=0 // pred_region
    _
  $region5: #{net_forward.4} parent=0 // pred_fallthru
    _
  // Predicated region
  $region6: #{net_forward.4} parent=0 // pred_check
    _
  $region7: #{net_forward.4} parent=0 // pred_check_branch
    %16 = sbr.rel (0) target = $region9
  $region8: #{net_forward.4} parent=0 // pred_region
    _
  $region9: #{net_forward.4} parent=0 // pred_fallthru
    _
  // Predicated region
  $region10: #{net_forward.4} parent=0 // pred_check
    _
  $region11: #{net_forward.4} parent=0 // pred_check_branch
    %18 = sbr.rel (0) target = $region13
  $region12: #{net_forward.4} parent=0 // pred_region
    _
  $region13: #{net_forward.4} parent=0 // pred_fallthru
    _
  // Predicated region
  $region14: #{net_forward.4} parent=0 // pred_check
    _
  $region15: #{net_forward.4} parent=0 // pred_check_branch
    %20 = sbr.rel (0) target = $region17
  $region16: #{net_forward.4} parent=0 // pred_region
    _
  $region17: #{net_forward.4} parent=0 // pred_fallthru
    _
  // Predicated region
  $region18: #{net_forward.4} parent=0 // pred_check
    _
  $region19: #{net_forward.4} parent=0 // pred_check_branch
    %22 = sbr.rel (0) target = $region21
  $region20: #{net_forward.4} parent=0 // pred_region
    _
  $region21: #{net_forward.4} parent=0 // pred_fallthru
    _
  // Predicated region
  $region22: #{net_forward.4} parent=0 // pred_check
    _
  $region23: #{net_forward.4} parent=0 // pred_check_branch
    %24 = sbr.rel (0) target = $region25
  $region24: #{net_forward.4} parent=0 // pred_region
    _
  $region25: #{net_forward.4} parent=0 // pred_fallthru
    _
  // Predicated region
  $region26: #{net_forward.4} parent=0 // pred_check
    _
  $region27: #{net_forward.4} parent=0 // pred_check_branch
    %26 = sbr.rel (0) target = $region29
  $region28: #{net_forward.4} parent=0 // pred_region
    _
  $region29: #{net_forward.4} parent=0 // pred_fallthru
    _
  // Predicated region
  $region30: #{net_forward.4} parent=0 // pred_check
    _
  $region31: #{net_forward.4} parent=0 // pred_check_branch
    %28 = sbr.rel (0) target = $region33
  $region32: #{net_forward.4} parent=0 // pred_region
    _
  $region33: #{net_forward.4} parent=0 // pred_fallthru
    _
  %v29 = vld [vmem:[%s4] sm:$0xff]
  %v30 = vld [vmem:[%s4 + $0x8] sm:$0xff]
  %v31 = vld [vmem:[%s4 + $0x10] sm:$0xff]
  %v32 = vld [vmem:[%s4 + $0x18] sm:$0xff]
  %v33 = vld [vmem:[%s4 + $0x20] sm:$0xf]
  %v34 = vld [vmem:[%s4 + $0x28] sm:$0xf]
  %v35 = vld [vmem:[%s0] sm:$0xff]
  %v36 = vld [vmem:[%s0 + $0x8] sm:$0xff]
  %v37 = vld [vmem:[%s0 + $0x10] sm:$0xff]
  %v38 = vld [vmem:[%s0 + $0x18] sm:$0xff]
  %v39 = vld [vmem:[%s0 + $0x20] sm:$0xff]
  %v40 = vld [vmem:[%s0 + $0x28] sm:$0xff]
  %v41 = vld [vmem:[%s0 + $0x30] sm:$0xff]
  %v42 = vld [vmem:[%s0 + $0x38] sm:$0xff]
  %v43 = vld [vmem:[%s0 + $0x40] sm:$0xff]
  %v44 = vld [vmem:[%s0 + $0x48] sm:$0xff]
  %v45 = vld [vmem:[%s0 + $0x50] sm:$0xff]
  %v46 = vld [vmem:[%s0 + $0x58] sm:$0xff]
  %v47 = vld [vmem:[%s0 + $0x60] sm:$0xff]
  %v48 = vld [vmem:[%s0 + $0x68] sm:$0xff]
  %v49 = vld [vmem:[%s0 + $0x70] sm:$0xff]
  %v50 = vld [vmem:[%s0 + $0x78] sm:$0xff]
  %v51 = vld [vmem:[%s0 + $0x80] sm:$0xff]
  %v52 = vld [vmem:[%s0 + $0x88] sm:$0xff]
  %v53 = vld [vmem:[%s0 + $0x90] sm:$0xff]
  %v54 = vld [vmem:[%s0 + $0x98] sm:$0xff]
  %v55 = vld [vmem:[%s0 + $0xa0] sm:$0xff]
  %v56 = vld [vmem:[%s0 + $0xa8] sm:$0xff]
  %v57 = vld [vmem:[%s0 + $0xb0] sm:$0xff]
  %v58 = vld [vmem:[%s0 + $0xb8] sm:$0xff]
  %v59 = vld [vmem:[%s0 + $0xc0] sm:$0xff]
  %v60 = vld [vmem:[%s0 + $0xc8] sm:$0xff]
  %v61 = vld [vmem:[%s0 + $0xd0] sm:$0xff]
  %v62 = vld [vmem:[%s0 + $0xd8] sm:$0xff]
  %v63 = vld [vmem:[%s0 + $0xe0] sm:$0xff]
  %v64 = vld [vmem:[%s0 + $0xe8] sm:$0xff]
  %v65 = vld [vmem:[%s0 + $0xf0] sm:$0xff]
  %v66 = vld [vmem:[%s0 + $0xf8] sm:$0x3]
  %vm67 = vcmask 998400
  %v69 = vsel %vm67, %v30, 0
  %v72 = vsel %vm67, %v32, 0
  %v75 = vsel %vm67, %v34, 0
  %vm77 = vcmask 1041408
  %v79 = vsel %vm77, %v66, 0
  %81 = vmatpush.msra.mxu0 %v50
  %82 = vmatpush.msra.mxu0 %v49
  %83 = vmatpush.msra.mxu0 %v48
  %84 = vmatpush.msra.mxu0 %v47
  %85 = vmatpush.msra.mxu0 %v46
  %86 = vmatpush.msra.mxu0 %v45
  %87 = vmatpush.msra.mxu0 %v44
  %88 = vmatpush.msra.mxu0 %v43
  %89 = vmatpush.msra.mxu0 %v42
  %90 = vmatpush.msra.mxu0 %v41
  %91 = vmatpush.msra.mxu0 %v40
  %92 = vmatpush.msra.mxu0 %v39
  %93 = vmatpush.msra.mxu0 %v38
  %94 = vmatpush.msra.mxu0 %v37
  %95 = vmatpush.msra.mxu0 %v36
  %96 = vmatpush.msra.mxu0 %v35
  %97 = vmatmul.f32.gmra.mxu0 %v29
  %v98 = vpop.f32.mrf.mxu0
  %v99 = vadd.f32 0.0, %v98
  %100 = vmatmul.f32.gmra.mxu0 %v31
  %v101 = vpop.f32.mrf.mxu0
  %v102 = vadd.f32 0.0, %v101
  %103 = vmatmul.f32.gmra.mxu0 %v33
  %v104 = vpop.f32.mrf.mxu0
  %v105 = vadd.f32 0.0, %v104
  %106 = vdwg.mxu0
  %107 = vmatpush.msra.mxu0 %v79
  %108 = vmatpush.msra.mxu0 %v65
  %109 = vmatpush.msra.mxu0 %v64
  %110 = vmatpush.msra.mxu0 %v63
  %111 = vmatpush.msra.mxu0 %v62
  %112 = vmatpush.msra.mxu0 %v61
  %113 = vmatpush.msra.mxu0 %v60
  %114 = vmatpush.msra.mxu0 %v59
  %115 = vmatpush.msra.mxu0 %v58
  %116 = vmatpush.msra.mxu0 %v57
  %117 = vmatpush.msra.mxu0 %v56
  %118 = vmatpush.msra.mxu0 %v55
  %119 = vmatpush.msra.mxu0 %v54
  %120 = vmatpush.msra.mxu0 %v53
  %121 = vmatpush.msra.mxu0 %v52
  %122 = vmatpush.msra.mxu0 %v51
  %123 = vmatmul.f32.gmra.mxu0 %v69
  %v124 = vpop.f32.mrf.mxu0
  %v125 = vadd.f32 %v99, %v124
  %126 = vmatmul.f32.gmra.mxu0 %v72
  %v127 = vpop.f32.mrf.mxu0
  %v128 = vadd.f32 %v102, %v127
  %129 = vmatmul.f32.gmra.mxu0 %v75
  %v130 = vpop.f32.mrf.mxu0
  %v131 = vadd.f32 %v105, %v130
  %132 = vdwg.mxu0
  %v133 = vld [vmem:[%s1] sm:$0xff]
  %v134 = vld [vmem:[%s1 + $0x8] sm:$0xff]
  %v135 = vld [vmem:[%s1 + $0x10] sm:$0xff]
  %v136 = vld [vmem:[%s1 + $0x18] sm:$0xff]
  %v137 = vld [vmem:[%s1 + $0x20] sm:$0xff]
  %v138 = vld [vmem:[%s1 + $0x28] sm:$0xff]
  %v139 = vld [vmem:[%s1 + $0x30] sm:$0xff]
  %v140 = vld [vmem:[%s1 + $0x38] sm:$0xff]
  %v141 = vld [vmem:[%s1 + $0x40] sm:$0xff]
  %v142 = vld [vmem:[%s1 + $0x48] sm:$0xff]
  %v143 = vld [vmem:[%s1 + $0x50] sm:$0xff]
  %v144 = vld [vmem:[%s1 + $0x58] sm:$0xff]
  %v145 = vld [vmem:[%s1 + $0x60] sm:$0xff]
  %v146 = vld [vmem:[%s1 + $0x68] sm:$0xff]
  %v147 = vld [vmem:[%s1 + $0x70] sm:$0xff]
  %v148 = vld [vmem:[%s1 + $0x78] sm:$0xff]
  %v149 = vld [vmem:[%s1 + $0x80] sm:$0xff]
  %v150 = vld [vmem:[%s1 + $0x88] sm:$0xff]
  %v151 = vld [vmem:[%s1 + $0x90] sm:$0xff]
  %v152 = vld [vmem:[%s1 + $0x98] sm:$0xff]
  %v153 = vld [vmem:[%s1 + $0xa0] sm:$0xff]
  %v154 = vld [vmem:[%s1 + $0xa8] sm:$0xff]
  %v155 = vld [vmem:[%s1 + $0xb0] sm:$0xff]
  %v156 = vld [vmem:[%s1 + $0xb8] sm:$0xff]
  %v157 = vld [vmem:[%s1 + $0xc0] sm:$0xff]
  %v158 = vld [vmem:[%s1 + $0xc8] sm:$0xff]
  %v159 = vld [vmem:[%s1 + $0xd0] sm:$0xff]
  %v160 = vld [vmem:[%s1 + $0xd8] sm:$0xff]
  %v161 = vld [vmem:[%s1 + $0xe0] sm:$0xff]
  %v162 = vld [vmem:[%s1 + $0xe8] sm:$0xff]
  %v163 = vld [vmem:[%s1 + $0xf0] sm:$0xff]
  %v164 = vld [vmem:[%s1 + $0xf8] sm:$0x3]
  %v166 = vsel %vm77, %v164, 0
  %168 = vmatpush.msra.mxu0 %v148
  %169 = vmatpush.msra.mxu0 %v147
  %170 = vmatpush.msra.mxu0 %v146
  %171 = vmatpush.msra.mxu0 %v145
  %172 = vmatpush.msra.mxu0 %v144
  %173 = vmatpush.msra.mxu0 %v143
  %174 = vmatpush.msra.mxu0 %v142
  %175 = vmatpush.msra.mxu0 %v141
  %176 = vmatpush.msra.mxu0 %v140
  %177 = vmatpush.msra.mxu0 %v139
  %178 = vmatpush.msra.mxu0 %v138
  %179 = vmatpush.msra.mxu0 %v137
  %180 = vmatpush.msra.mxu0 %v136
  %181 = vmatpush.msra.mxu0 %v135
  %182 = vmatpush.msra.mxu0 %v134
  %183 = vmatpush.msra.mxu0 %v133
  %184 = vmatmul.f32.gmra.mxu0 %v29
  %v185 = vpop.f32.mrf.mxu0
  %v186 = vadd.f32 0.0, %v185
  %187 = vmatmul.f32.gmra.mxu0 %v31
  %v188 = vpop.f32.mrf.mxu0
  %v189 = vadd.f32 0.0, %v188
  %190 = vmatmul.f32.gmra.mxu0 %v33
  %v191 = vpop.f32.mrf.mxu0
  %v192 = vadd.f32 0.0, %v191
  %193 = vdwg.mxu0
  %194 = vmatpush.msra.mxu0 %v166
  %195 = vmatpush.msra.mxu0 %v163
  %196 = vmatpush.msra.mxu0 %v162
  %197 = vmatpush.msra.mxu0 %v161
  %198 = vmatpush.msra.mxu0 %v160
  %199 = vmatpush.msra.mxu0 %v159
  %200 = vmatpush.msra.mxu0 %v158
  %201 = vmatpush.msra.mxu0 %v157
  %202 = vmatpush.msra.mxu0 %v156
  %203 = vmatpush.msra.mxu0 %v155
  %204 = vmatpush.msra.mxu0 %v154
  %205 = vmatpush.msra.mxu0 %v153
  %206 = vmatpush.msra.mxu0 %v152
  %207 = vmatpush.msra.mxu0 %v151
  %208 = vmatpush.msra.mxu0 %v150
  %209 = vmatpush.msra.mxu0 %v149
  %210 = vmatmul.f32.gmra.mxu0 %v69
  %v211 = vpop.f32.mrf.mxu0
  %v212 = vadd.f32 %v186, %v211
  %213 = vmatmul.f32.gmra.mxu0 %v72
  %v214 = vpop.f32.mrf.mxu0
  %v215 = vadd.f32 %v189, %v214
  %216 = vmatmul.f32.gmra.mxu0 %v75
  %v217 = vpop.f32.mrf.mxu0
  %v218 = vadd.f32 %v192, %v217
  %219 = vdwg.mxu0
  %v220 = vmax.f32 %v125, %v212
  %v221 = vmax.f32 %v128, %v215
  %v222 = vmax.f32 %v131, %v218
  %v223 = vld [vmem:[%s2] sm:$0xff]
  %v224 = vld [vmem:[%s2 + $0x8] sm:$0xff]
  %v225 = vld [vmem:[%s2 + $0x10] sm:$0xff]
  %v226 = vld [vmem:[%s2 + $0x18] sm:$0xff]
  %v227 = vld [vmem:[%s2 + $0x20] sm:$0xff]
  %v228 = vld [vmem:[%s2 + $0x28] sm:$0xff]
  %v229 = vld [vmem:[%s2 + $0x30] sm:$0xff]
  %v230 = vld [vmem:[%s2 + $0x38] sm:$0xff]
  %v231 = vld [vmem:[%s2 + $0x40] sm:$0xff]
  %v232 = vld [vmem:[%s2 + $0x48] sm:$0xff]
  %v233 = vld [vmem:[%s2 + $0x50] sm:$0xff]
  %v234 = vld [vmem:[%s2 + $0x58] sm:$0xff]
  %v235 = vld [vmem:[%s2 + $0x60] sm:$0xff]
  %v236 = vld [vmem:[%s2 + $0x68] sm:$0xff]
  %v237 = vld [vmem:[%s2 + $0x70] sm:$0xff]
  %v238 = vld [vmem:[%s2 + $0x78] sm:$0xff]
  %v239 = vld [vmem:[%s2 + $0x80] sm:$0xff]
  %v240 = vld [vmem:[%s2 + $0x88] sm:$0xff]
  %v241 = vld [vmem:[%s2 + $0x90] sm:$0xff]
  %v242 = vld [vmem:[%s2 + $0x98] sm:$0xff]
  %v243 = vld [vmem:[%s2 + $0xa0] sm:$0xff]
  %v244 = vld [vmem:[%s2 + $0xa8] sm:$0xff]
  %v245 = vld [vmem:[%s2 + $0xb0] sm:$0xff]
  %v246 = vld [vmem:[%s2 + $0xb8] sm:$0xff]
  %v247 = vld [vmem:[%s2 + $0xc0] sm:$0xff]
  %v248 = vld [vmem:[%s2 + $0xc8] sm:$0xff]
  %v249 = vld [vmem:[%s2 + $0xd0] sm:$0xff]
  %v250 = vld [vmem:[%s2 + $0xd8] sm:$0xff]
  %v251 = vld [vmem:[%s2 + $0xe0] sm:$0xff]
  %v252 = vld [vmem:[%s2 + $0xe8] sm:$0xff]
  %v253 = vld [vmem:[%s2 + $0xf0] sm:$0xff]
  %v254 = vld [vmem:[%s2 + $0xf8] sm:$0x3]
  %v256 = vsel %vm77, %v254, 0
  %258 = vmatpush.msra.mxu0 %v238
  %259 = vmatpush.msra.mxu0 %v237
  %260 = vmatpush.msra.mxu0 %v236
  %261 = vmatpush.msra.mxu0 %v235
  %262 = vmatpush.msra.mxu0 %v234
  %263 = vmatpush.msra.mxu0 %v233
  %264 = vmatpush.msra.mxu0 %v232
  %265 = vmatpush.msra.mxu0 %v231
  %266 = vmatpush.msra.mxu0 %v230
  %267 = vmatpush.msra.mxu0 %v229
  %268 = vmatpush.msra.mxu0 %v228
  %269 = vmatpush.msra.mxu0 %v227
  %270 = vmatpush.msra.mxu0 %v226
  %271 = vmatpush.msra.mxu0 %v225
  %272 = vmatpush.msra.mxu0 %v224
  %273 = vmatpush.msra.mxu0 %v223
  %274 = vmatmul.f32.gmra.mxu0 %v29
  %v275 = vpop.f32.mrf.mxu0
  %v276 = vadd.f32 0.0, %v275
  %277 = vmatmul.f32.gmra.mxu0 %v31
  %v278 = vpop.f32.mrf.mxu0
  %v279 = vadd.f32 0.0, %v278
  %280 = vmatmul.f32.gmra.mxu0 %v33
  %v281 = vpop.f32.mrf.mxu0
  %v282 = vadd.f32 0.0, %v281
  %283 = vdwg.mxu0
  %284 = vmatpush.msra.mxu0 %v256
  %285 = vmatpush.msra.mxu0 %v253
  %286 = vmatpush.msra.mxu0 %v252
  %287 = vmatpush.msra.mxu0 %v251
  %288 = vmatpush.msra.mxu0 %v250
  %289 = vmatpush.msra.mxu0 %v249
  %290 = vmatpush.msra.mxu0 %v248
  %291 = vmatpush.msra.mxu0 %v247
  %292 = vmatpush.msra.mxu0 %v246
  %293 = vmatpush.msra.mxu0 %v245
  %294 = vmatpush.msra.mxu0 %v244
  %295 = vmatpush.msra.mxu0 %v243
  %296 = vmatpush.msra.mxu0 %v242
  %297 = vmatpush.msra.mxu0 %v241
  %298 = vmatpush.msra.mxu0 %v240
  %299 = vmatpush.msra.mxu0 %v239
  %300 = vmatmul.f32.gmra.mxu0 %v69
  %v301 = vpop.f32.mrf.mxu0
  %v302 = vadd.f32 %v276, %v301
  %303 = vmatmul.f32.gmra.mxu0 %v72
  %v304 = vpop.f32.mrf.mxu0
  %v305 = vadd.f32 %v279, %v304
  %306 = vmatmul.f32.gmra.mxu0 %v75
  %v307 = vpop.f32.mrf.mxu0
  %v308 = vadd.f32 %v282, %v307
  %309 = vdwg.mxu0
  %v310 = vmax.f32 %v220, %v302
  %v311 = vmax.f32 %v221, %v305
  %v312 = vmax.f32 %v222, %v308
  %v313 = vld [vmem:[%s3] sm:$0xff]
  %v314 = vld [vmem:[%s3 + $0x8] sm:$0xff]
  %v315 = vld [vmem:[%s3 + $0x10] sm:$0xff]
  %v316 = vld [vmem:[%s3 + $0x18] sm:$0xff]
  %v317 = vld [vmem:[%s3 + $0x20] sm:$0xff]
  %v318 = vld [vmem:[%s3 + $0x28] sm:$0xff]
  %v319 = vld [vmem:[%s3 + $0x30] sm:$0xff]
  %v320 = vld [vmem:[%s3 + $0x38] sm:$0xff]
  %v321 = vld [vmem:[%s3 + $0x40] sm:$0xff]
  %v322 = vld [vmem:[%s3 + $0x48] sm:$0xff]
  %v323 = vld [vmem:[%s3 + $0x50] sm:$0xff]
  %v324 = vld [vmem:[%s3 + $0x58] sm:$0xff]
  %v325 = vld [vmem:[%s3 + $0x60] sm:$0xff]
  %v326 = vld [vmem:[%s3 + $0x68] sm:$0xff]
  %v327 = vld [vmem:[%s3 + $0x70] sm:$0xff]
  %v328 = vld [vmem:[%s3 + $0x78] sm:$0xff]
  %v329 = vld [vmem:[%s3 + $0x80] sm:$0xff]
  %v330 = vld [vmem:[%s3 + $0x88] sm:$0xff]
  %v331 = vld [vmem:[%s3 + $0x90] sm:$0xff]
  %v332 = vld [vmem:[%s3 + $0x98] sm:$0xff]
  %v333 = vld [vmem:[%s3 + $0xa0] sm:$0xff]
  %v334 = vld [vmem:[%s3 + $0xa8] sm:$0xff]
  %v335 = vld [vmem:[%s3 + $0xb0] sm:$0xff]
  %v336 = vld [vmem:[%s3 + $0xb8] sm:$0xff]
  %v337 = vld [vmem:[%s3 + $0xc0] sm:$0xff]
  %v338 = vld [vmem:[%s3 + $0xc8] sm:$0xff]
  %v339 = vld [vmem:[%s3 + $0xd0] sm:$0xff]
  %v340 = vld [vmem:[%s3 + $0xd8] sm:$0xff]
  %v341 = vld [vmem:[%s3 + $0xe0] sm:$0xff]
  %v342 = vld [vmem:[%s3 + $0xe8] sm:$0xff]
  %v343 = vld [vmem:[%s3 + $0xf0] sm:$0xff]
  %v344 = vld [vmem:[%s3 + $0xf8] sm:$0x3]
  %v346 = vsel %vm77, %v344, 0
  %348 = vmatpush.msra.mxu0 %v328
  %349 = vmatpush.msra.mxu0 %v327
  %350 = vmatpush.msra.mxu0 %v326
  %351 = vmatpush.msra.mxu0 %v325
  %352 = vmatpush.msra.mxu0 %v324
  %353 = vmatpush.msra.mxu0 %v323
  %354 = vmatpush.msra.mxu0 %v322
  %355 = vmatpush.msra.mxu0 %v321
  %356 = vmatpush.msra.mxu0 %v320
  %357 = vmatpush.msra.mxu0 %v319
  %358 = vmatpush.msra.mxu0 %v318
  %359 = vmatpush.msra.mxu0 %v317
  %360 = vmatpush.msra.mxu0 %v316
  %361 = vmatpush.msra.mxu0 %v315
  %362 = vmatpush.msra.mxu0 %v314
  %363 = vmatpush.msra.mxu0 %v313
  %364 = vmatmul.f32.gmra.mxu0 %v29
  %v365 = vpop.f32.mrf.mxu0
  %v366 = vadd.f32 0.0, %v365
  %367 = vmatmul.f32.gmra.mxu0 %v31
  %v368 = vpop.f32.mrf.mxu0
  %v369 = vadd.f32 0.0, %v368
  %370 = vmatmul.f32.gmra.mxu0 %v33
  %v371 = vpop.f32.mrf.mxu0
  %v372 = vadd.f32 0.0, %v371
  %373 = vdwg.mxu0
  %374 = vmatpush.msra.mxu0 %v346
  %375 = vmatpush.msra.mxu0 %v343
  %376 = vmatpush.msra.mxu0 %v342
  %377 = vmatpush.msra.mxu0 %v341
  %378 = vmatpush.msra.mxu0 %v340
  %379 = vmatpush.msra.mxu0 %v339
  %380 = vmatpush.msra.mxu0 %v338
  %381 = vmatpush.msra.mxu0 %v337
  %382 = vmatpush.msra.mxu0 %v336
  %383 = vmatpush.msra.mxu0 %v335
  %384 = vmatpush.msra.mxu0 %v334
  %385 = vmatpush.msra.mxu0 %v333
  %386 = vmatpush.msra.mxu0 %v332
  %387 = vmatpush.msra.mxu0 %v331
  %388 = vmatpush.msra.mxu0 %v330
  %389 = vmatpush.msra.mxu0 %v329
  %390 = vmatmul.f32.gmra.mxu0 %v69
  %v391 = vpop.f32.mrf.mxu0
  %v392 = vadd.f32 %v366, %v391
  %393 = vmatmul.f32.gmra.mxu0 %v72
  %v394 = vpop.f32.mrf.mxu0
  %v395 = vadd.f32 %v369, %v394
  %396 = vmatmul.f32.gmra.mxu0 %v75
  %v397 = vpop.f32.mrf.mxu0
  %v398 = vadd.f32 %v372, %v397
  %399 = vdwg.mxu0
  %v400 = vmax.f32 %v310, %v392
  %v401 = vmax.f32 %v311, %v395
  %v402 = vmax.f32 %v312, %v398
  %v403 = vld [vmem:[%s5] sm:$0xff]
  %v404 = vld [vmem:[%s5 + $0x8] sm:$0xff]
  %v405 = vld [vmem:[%s5 + $0x10] sm:$0xf]
  %407 = vset.pattern.permute.xlu0 0
  %408 = vperm.xlu0 %407, %v403
  %v409 = vpop.permute.xlu0 %408
  %412 = vset.pattern.permute.xlu0 0
  %413 = vperm.xlu0 %412, %v404
  %v414 = vpop.permute.xlu0 %413
  %417 = vset.pattern.permute.xlu0 0
  %418 = vperm.xlu0 %417, %v405
  %v419 = vpop.permute.xlu0 %418
  %v421 = vadd.f32 %v400, %v409
  %v422 = vadd.f32 %v401, %v414
  %v423 = vadd.f32 %v402, %v419
  %v424 = vmax.f32 %v421, 0.0
  %v425 = vmax.f32 %v422, 0.0
  %v426 = vmax.f32 %v423, 0.0
  %vm427 = vcmask 523264
  %v428 = vsel %vm427, %v424, 0.0
  %429 = vadd.xlane.f32.xlu0 %v428
  %v430 = vpop.xlane.xlu0 %429
  %v431 = vsel %vm427, %v425, 0.0
  %432 = vadd.xlane.f32.xlu0 %v431
  %v433 = vpop.xlane.xlu0 %432
  %vm434 = vcmask 519168
  %v435 = vsel %vm434, %v426, 0.0
  %436 = vadd.xlane.f32.xlu0 %v435
  %v437 = vpop.xlane.xlu0 %436
  %v438 = vmul.f32 %v430, 0.015625
  %v439 = vmul.f32 %v433, 0.015625
  %v440 = vmul.f32 %v437, 0.015625
  %v441 = vmul.f32 %v424, %v424
  %v442 = vmul.f32 %v425, %v425
  %v443 = vmul.f32 %v426, %v426
  %v444 = vsel %vm427, %v441, 0.0
  %445 = vadd.xlane.f32.xlu0 %v444
  %v446 = vpop.xlane.xlu0 %445
  %v447 = vsel %vm427, %v442, 0.0
  %448 = vadd.xlane.f32.xlu0 %v447
  %v449 = vpop.xlane.xlu0 %448
  %v450 = vsel %vm434, %v443, 0.0
  %451 = vadd.xlane.f32.xlu0 %v450
  %v452 = vpop.xlane.xlu0 %451
  %v453 = vmul.f32 %v446, 0.015625
  %v454 = vmul.f32 %v449, 0.015625
  %v455 = vmul.f32 %v452, 0.015625
  %v456 = vmul.f32 %v438, %v438
  %v457 = vmul.f32 %v439, %v439
  %v458 = vmul.f32 %v440, %v440
  %v459 = vsub.f32 %v453, %v456
  %v460 = vsub.f32 %v454, %v457
  %v461 = vsub.f32 %v455, %v458
  %v462 = vmax.f32 %v459, 0.0
  %v463 = vmax.f32 %v460, 0.0
  %v464 = vmax.f32 %v461, 0.0
  %v465 = vsub.f32 %v424, %v438
  %v466 = vsub.f32 %v425, %v439
  %v467 = vsub.f32 %v426, %v440
  %v468 = vadd.f32 %v462, 1e-05
  %v469 = vadd.f32 %v463, 1e-05
  %v470 = vadd.f32 %v464, 1e-05
  %v471 = vrsqrt.pop %v468
  %v472 = vmul.f32 %v471, %v468
  %v473 = vmul.f32 %v472, %v471
  %v474 = vmul.f32 0.5, %v473
  %v475 = vsub.f32 1.5, %v474
  %v476 = vmul.f32 %v471, %v475
  %vm477 = vweird.f32 %v468
  %vm478 = vweird.f32 %v471
  %vm479 = vmor %vm477, %vm478
  %v480 = vsel %vm479, %v471, %v476
  %v481 = vrsqrt.pop %v469
  %v482 = vmul.f32 %v481, %v469
  %v483 = vmul.f32 %v482, %v481
  %v484 = vmul.f32 0.5, %v483
  %v485 = vsub.f32 1.5, %v484
  %v486 = vmul.f32 %v481, %v485
  %vm487 = vweird.f32 %v469
  %vm488 = vweird.f32 %v481
  %vm489 = vmor %vm487, %vm488
  %v490 = vsel %vm489, %v481, %v486
  %v491 = vrsqrt.pop %v470
  %v492 = vmul.f32 %v491, %v470
  %v493 = vmul.f32 %v492, %v491
  %v494 = vmul.f32 0.5, %v493
  %v495 = vsub.f32 1.5, %v494
  %v496 = vmul.f32 %v491, %v495
  %vm497 = vweird.f32 %v470
  %vm498 = vweird.f32 %v491
  %vm499 = vmor %vm497, %vm498
  %v500 = vsel %vm499, %v491, %v496
  %v501 = vmul.f32 %v465, %v480
  %v502 = vmul.f32 %v466, %v490
  %v503 = vmul.f32 %v467, %v500
  %v504 = vld [vmem:[%s6] sm:$0xff]
  %v505 = vld [vmem:[%s6 + $0x8] sm:$0xff]
  %v506 = vld [vmem:[%s6 + $0x10] sm:$0xf]
  %508 = vset.pattern.permute.xlu0 0
  %509 = vperm.xlu0 %508, %v504
  %v510 = vpop.permute.xlu0 %509
  %513 = vset.pattern.permute.xlu0 0
  %514 = vperm.xlu0 %513, %v505
  %v515 = vpop.permute.xlu0 %514
  %518 = vset.pattern.permute.xlu0 0
  %519 = vperm.xlu0 %518, %v506
  %v520 = vpop.permute.xlu0 %519
  %v522 = vmul.f32 %v501, %v510
  %v523 = vmul.f32 %v502, %v515
  %v524 = vmul.f32 %v503, %v520
  %v525 = vld [vmem:[%s7] sm:$0xff]
  %v526 = vld [vmem:[%s7 + $0x8] sm:$0xff]
  %v527 = vld [vmem:[%s7 + $0x10] sm:$0xf]
  %529 = vset.pattern.permute.xlu0 0
  %530 = vperm.xlu0 %529, %v525
  %v531 = vpop.permute.xlu0 %530
  %534 = vset.pattern.permute.xlu0 0
  %535 = vperm.xlu0 %534, %v526
  %v536 = vpop.permute.xlu0 %535
  %539 = vset.pattern.permute.xlu0 0
  %540 = vperm.xlu0 %539, %v527
  %v541 = vpop.permute.xlu0 %540
  %v543 = vadd.f32 %v522, %v531
  %v544 = vadd.f32 %v523, %v536
  %v545 = vadd.f32 %v524, %v541
  %546 = vst.msk [vmem:[%s8] sm:$0xff] %vm427, %v543
  %547 = vst.msk [vmem:[%s8 + $0x8] sm:$0xff] %vm427, %v544
  %548 = vst.msk [vmem:[%s8 + $0x10] sm:$0xf] %vm434, %v545
  // Predicated region
  $region34: #{net_forward.4} parent=0 // pred_check
    _
  $region35: #{net_forward.4} parent=0 // pred_check_branch
    %550 = sbr.rel (0) target = $region37
  $region36: #{net_forward.4} parent=0 // pred_region
    _
  $region37: #{net_forward.4} parent=0 // pred_fallthru
    _
  // Predicated region
  $region38: #{net_forward.4} parent=0 // pred_check
    _
  $region39: #{net_forward.4} parent=0 // pred_check_branch
    %552 = sbr.rel (0) target = $region41
  $region40: #{net_forward.4} parent=0 // pred_region
    _
  $region41: #{net_forward.4} parent=0 // pred_fallthru
    _

// kernel: net_forward.5
$region0: #{net_forward.5}
  #allocation0 [shape = 'u32[]', space=smem, size = 0x4, offset = 0x4, fixed_abs, tag = 'smem constant byte address 0x4 - core index']
  #allocation1 [shape = 'u32[72,128]{1,0:T(1,128)}', space=vmem, size = 0x9000, scoped, tag = 'internal scratch']
  %s0 = inlined_call_operand.vmem [shape: f32[320,4], index: 0, kind: input, shape index: {}]
  %s1 = inlined_call_operand.vmem [shape: f32[50,320], index: 1, kind: input, shape index: {}]
  %s2 = inlined_call_operand.vmem [shape: f32[50,1], index: 2, kind: input, shape index: {}]
  %s3 = inlined_call_operand.vmem [shape: f32[10,50], index: 3, kind: input, shape index: {}]
  %s4 = inlined_call_operand.vmem [shape: f32[10,1], index: 4, kind: input, shape index: {}]
  %s5 = inlined_call_operand.vmem [shape: f32[10,4], index: 5, kind: output, shape index: {}]
  %s6 = sld [smem:[#allocation0]]
  $region30: #{net_forward.5} parent=0
    _
  %s8 = ssub.s32 1, %s6
  %s9 = scalar_select 0, %s8, %s6
  // Predicated region
  $region2: #{net_forward.5} parent=0 // pred_check
    _
  $region3: #{net_forward.5} parent=0 // pred_check_branch
    %11 = sbr.rel (0) target = $region5
  $region4: #{net_forward.5} parent=0 // pred_region
    _
  $region5: #{net_forward.5} parent=0 // pred_fallthru
    _
  // Predicated region
  $region6: #{net_forward.5} parent=0 // pred_check
    _
  $region7: #{net_forward.5} parent=0 // pred_check_branch
    %13 = sbr.rel (0) target = $region9
  $region8: #{net_forward.5} parent=0 // pred_region
    _
  $region9: #{net_forward.5} parent=0 // pred_fallthru
    _
  // Predicated region
  $region10: #{net_forward.5} parent=0 // pred_check
    _
  $region11: #{net_forward.5} parent=0 // pred_check_branch
    %15 = sbr.rel (0) target = $region13
  $region12: #{net_forward.5} parent=0 // pred_region
    _
  $region13: #{net_forward.5} parent=0 // pred_fallthru
    _
  // Predicated region
  $region14: #{net_forward.5} parent=0 // pred_check
    _
  $region15: #{net_forward.5} parent=0 // pred_check_branch
    %17 = sbr.rel (0) target = $region17
  $region16: #{net_forward.5} parent=0 // pred_region
    _
  $region17: #{net_forward.5} parent=0 // pred_fallthru
    _
  // Predicated region
  $region18: #{net_forward.5} parent=0 // pred_check
    _
  $region19: #{net_forward.5} parent=0 // pred_check_branch
    %19 = sbr.rel (0) target = $region21
  $region20: #{net_forward.5} parent=0 // pred_region
    _
  $region21: #{net_forward.5} parent=0 // pred_fallthru
    _
  %v20 = vld [vmem:[%s1] sm:$0xff]
  %v21 = vld [vmem:[%s1 + $0x8] sm:$0xff]
  %v22 = vld [vmem:[%s1 + $0x10] sm:$0xff]
  %v23 = vld [vmem:[%s1 + $0x18] sm:$0xff]
  %v24 = vld [vmem:[%s1 + $0x20] sm:$0xff]
  %v25 = vld [vmem:[%s1 + $0x28] sm:$0xff]
  %v26 = vld [vmem:[%s1 + $0x30] sm:$0xff]
  %v27 = vld [vmem:[%s1 + $0x38] sm:$0xff]
  %v28 = vld [vmem:[%s1 + $0x40] sm:$0xff]
  %v29 = vld [vmem:[%s1 + $0x48] sm:$0xff]
  %v30 = vld [vmem:[%s1 + $0x50] sm:$0xff]
  %v31 = vld [vmem:[%s1 + $0x58] sm:$0xff]
  %v32 = vld [vmem:[%s1 + $0x60] sm:$0xff]
  %v33 = vld [vmem:[%s1 + $0x68] sm:$0xff]
  %v34 = vld [vmem:[%s1 + $0x70] sm:$0xff]
  %v35 = vld [vmem:[%s1 + $0x78] sm:$0xff]
  %v36 = vld [vmem:[%s1 + $0x80] sm:$0xff]
  %v37 = vld [vmem:[%s1 + $0x88] sm:$0xff]
  %v38 = vld [vmem:[%s1 + $0x90] sm:$0x3]
  %v39 = vld [vmem:[%s1 + $0x98] sm:$0x3]
  %v40 = vld [vmem:[%s1 + $0xa0] sm:$0x3]
  %v41 = vld [vmem:[%s0] sm:$0xff]
  %v42 = vld [vmem:[%s0 + $0x8] sm:$0xff]
  %v43 = vld [vmem:[%s0 + $0x10] sm:$0xff]
  %v44 = vld [vmem:[%s0 + $0x18] sm:$0xff]
  %v45 = vld [vmem:[%s0 + $0x20] sm:$0xff]
  %v46 = vld [vmem:[%s0 + $0x28] sm:$0xff]
  %v47 = vld [vmem:[%s0 + $0x30] sm:$0xff]
  %v48 = vld [vmem:[%s0 + $0x38] sm:$0xff]
  %v49 = vld [vmem:[%s0 + $0x40] sm:$0xff]
  %v50 = vld [vmem:[%s0 + $0x48] sm:$0xff]
  %v51 = vld [vmem:[%s0 + $0x50] sm:$0xff]
  %v52 = vld [vmem:[%s0 + $0x58] sm:$0xff]
  %v53 = vld [vmem:[%s0 + $0x60] sm:$0xff]
  %v54 = vld [vmem:[%s0 + $0x68] sm:$0xff]
  %v55 = vld [vmem:[%s0 + $0x70] sm:$0xff]
  %v56 = vld [vmem:[%s0 + $0x78] sm:$0xff]
  %v57 = vld [vmem:[%s0 + $0x80] sm:$0xff]
  %v58 = vld [vmem:[%s0 + $0x88] sm:$0xff]
  %v59 = vld [vmem:[%s0 + $0x90] sm:$0xff]
  %v60 = vld [vmem:[%s0 + $0x98] sm:$0xff]
  %v61 = vld [vmem:[%s0 + $0xa0] sm:$0xff]
  %v62 = vld [vmem:[%s0 + $0xa8] sm:$0xff]
  %v63 = vld [vmem:[%s0 + $0xb0] sm:$0xff]
  %v64 = vld [vmem:[%s0 + $0xb8] sm:$0xff]
  %v65 = vld [vmem:[%s0 + $0xc0] sm:$0xff]
  %v66 = vld [vmem:[%s0 + $0xc8] sm:$0xff]
  %v67 = vld [vmem:[%s0 + $0xd0] sm:$0xff]
  %v68 = vld [vmem:[%s0 + $0xd8] sm:$0xff]
  %v69 = vld [vmem:[%s0 + $0xe0] sm:$0xff]
  %v70 = vld [vmem:[%s0 + $0xe8] sm:$0xff]
  %v71 = vld [vmem:[%s0 + $0xf0] sm:$0xff]
  %v72 = vld [vmem:[%s0 + $0xf8] sm:$0xff]
  %v73 = vld [vmem:[%s0 + $0x100] sm:$0xff]
  %v74 = vld [vmem:[%s0 + $0x108] sm:$0xff]
  %v75 = vld [vmem:[%s0 + $0x110] sm:$0xff]
  %v76 = vld [vmem:[%s0 + $0x118] sm:$0xff]
  %v77 = vld [vmem:[%s0 + $0x120] sm:$0xff]
  %v78 = vld [vmem:[%s0 + $0x128] sm:$0xff]
  %v79 = vld [vmem:[%s0 + $0x130] sm:$0xff]
  %v80 = vld [vmem:[%s0 + $0x138] sm:$0xff]
  %v81 = vld [vmem:[%s2] sm:$0xff]
  %v82 = vld [vmem:[%s2 + $0x8] sm:$0xff]
  %v83 = vld [vmem:[%s2 + $0x10] sm:$0xff]
  %v84 = vld [vmem:[%s2 + $0x18] sm:$0xff]
  %v85 = vld [vmem:[%s2 + $0x20] sm:$0xff]
  %v86 = vld [vmem:[%s2 + $0x28] sm:$0xff]
  %v87 = vld [vmem:[%s2 + $0x30] sm:$0x3]
  %89 = vset.pattern.permute.xlu0 0
  %90 = vperm.xlu0 %89, %v81
  %v91 = vpop.permute.xlu0 %90
  %94 = vset.pattern.permute.xlu0 0
  %95 = vperm.xlu0 %94, %v82
  %v96 = vpop.permute.xlu0 %95
  %99 = vset.pattern.permute.xlu0 0
  %100 = vperm.xlu0 %99, %v83
  %v101 = vpop.permute.xlu0 %100
  %104 = vset.pattern.permute.xlu0 0
  %105 = vperm.xlu0 %104, %v84
  %v106 = vpop.permute.xlu0 %105
  %109 = vset.pattern.permute.xlu0 0
  %110 = vperm.xlu0 %109, %v85
  %v111 = vpop.permute.xlu0 %110
  %114 = vset.pattern.permute.xlu0 0
  %115 = vperm.xlu0 %114, %v86
  %v116 = vpop.permute.xlu0 %115
  %119 = vset.pattern.permute.xlu0 0
  %120 = vperm.xlu0 %119, %v87
  %v121 = vpop.permute.xlu0 %120
  %vm123 = vcmask 523264
  %v125 = vsel %vm123, %v22, 0
  %v128 = vsel %vm123, %v25, 0
  %v131 = vsel %vm123, %v28, 0
  %v134 = vsel %vm123, %v31, 0
  %v137 = vsel %vm123, %v34, 0
  %v140 = vsel %vm123, %v37, 0
  %v143 = vsel %vm123, %v40, 0
  %145 = vmatpush.msra.mxu0 %v56
  %146 = vmatpush.msra.mxu0 %v55
  %147 = vmatpush.msra.mxu0 %v54
  %148 = vmatpush.msra.mxu0 %v53
  %149 = vmatpush.msra.mxu0 %v52
  %150 = vmatpush.msra.mxu0 %v51
  %151 = vmatpush.msra.mxu0 %v50
  %152 = vmatpush.msra.mxu0 %v49
  %153 = vmatpush.msra.mxu0 %v48
  %154 = vmatpush.msra.mxu0 %v47
  %155 = vmatpush.msra.mxu0 %v46
  %156 = vmatpush.msra.mxu0 %v45
  %157 = vmatpush.msra.mxu0 %v44
  %158 = vmatpush.msra.mxu0 %v43
  %159 = vmatpush.msra.mxu0 %v42
  %160 = vmatpush.msra.mxu0 %v41
  %161 = vmatmul.f32.gmra.mxu0 %v20
  %v162 = vpop.f32.mrf.mxu0
  %v163 = vadd.f32 %v91, %v162
  %164 = vmatmul.f32.gmra.mxu0 %v23
  %v165 = vpop.f32.mrf.mxu0
  %v166 = vadd.f32 %v96, %v165
  %167 = vmatmul.f32.gmra.mxu0 %v26
  %v168 = vpop.f32.mrf.mxu0
  %v169 = vadd.f32 %v101, %v168
  %170 = vmatmul.f32.gmra.mxu0 %v29
  %v171 = vpop.f32.mrf.mxu0
  %v172 = vadd.f32 %v106, %v171
  %173 = vmatmul.f32.gmra.mxu0 %v32
  %v174 = vpop.f32.mrf.mxu0
  %v175 = vadd.f32 %v111, %v174
  %176 = vmatmul.f32.gmra.mxu0 %v35
  %v177 = vpop.f32.mrf.mxu0
  %v178 = vadd.f32 %v116, %v177
  %179 = vmatmul.f32.gmra.mxu0 %v38
  %v180 = vpop.f32.mrf.mxu0
  %v181 = vadd.f32 %v121, %v180
  %182 = vdwg.mxu0
  %183 = vmatpush.msra.mxu0 %v72
  %184 = vmatpush.msra.mxu0 %v71
  %185 = vmatpush.msra.mxu0 %v70
  %186 = vmatpush.msra.mxu0 %v69
  %187 = vmatpush.msra.mxu0 %v68
  %188 = vmatpush.msra.mxu0 %v67
  %189 = vmatpush.msra.mxu0 %v66
  %190 = vmatpush.msra.mxu0 %v65
  %191 = vmatpush.msra.mxu0 %v64
  %192 = vmatpush.msra.mxu0 %v63
  %193 = vmatpush.msra.mxu0 %v62
  %194 = vmatpush.msra.mxu0 %v61
  %195 = vmatpush.msra.mxu0 %v60
  %196 = vmatpush.msra.mxu0 %v59
  %197 = vmatpush.msra.mxu0 %v58
  %198 = vmatpush.msra.mxu0 %v57
  %199 = vmatmul.f32.gmra.mxu0 %v21
  %v200 = vpop.f32.mrf.mxu0
  %v201 = vadd.f32 %v163, %v200
  %202 = vmatmul.f32.gmra.mxu0 %v24
  %v203 = vpop.f32.mrf.mxu0
  %v204 = vadd.f32 %v166, %v203
  %205 = vmatmul.f32.gmra.mxu0 %v27
  %v206 = vpop.f32.mrf.mxu0
  %v207 = vadd.f32 %v169, %v206
  %208 = vmatmul.f32.gmra.mxu0 %v30
  %v209 = vpop.f32.mrf.mxu0
  %v210 = vadd.f32 %v172, %v209
  %211 = vmatmul.f32.gmra.mxu0 %v33
  %v212 = vpop.f32.mrf.mxu0
  %v213 = vadd.f32 %v175, %v212
  %214 = vmatmul.f32.gmra.mxu0 %v36
  %v215 = vpop.f32.mrf.mxu0
  %v216 = vadd.f32 %v178, %v215
  %217 = vmatmul.f32.gmra.mxu0 %v39
  %v218 = vpop.f32.mrf.mxu0
  %v219 = vadd.f32 %v181, %v218
  %220 = vdwg.mxu0
  %221 = vmatpush.msra.mxu0 0.0
  %222 = vmatpush.msra.mxu0 0.0
  %223 = vmatpush.msra.mxu0 0.0
  %224 = vmatpush.msra.mxu0 0.0
  %225 = vmatpush.msra.mxu0 0.0
  %226 = vmatpush.msra.mxu0 0.0
  %227 = vmatpush.msra.mxu0 0.0
  %228 = vmatpush.msra.mxu0 0.0
  %229 = vmatpush.msra.mxu0 %v80
  %230 = vmatpush.msra.mxu0 %v79
  %231 = vmatpush.msra.mxu0 %v78
  %232 = vmatpush.msra.mxu0 %v77
  %233 = vmatpush.msra.mxu0 %v76
  %234 = vmatpush.msra.mxu0 %v75
  %235 = vmatpush.msra.mxu0 %v74
  %236 = vmatpush.msra.mxu0 %v73
  %237 = vmatmul.f32.gmra.mxu0 %v125
  %v238 = vpop.f32.mrf.mxu0
  %v239 = vadd.f32 %v201, %v238
  %240 = vmatmul.f32.gmra.mxu0 %v128
  %v241 = vpop.f32.mrf.mxu0
  %v242 = vadd.f32 %v204, %v241
  %243 = vmatmul.f32.gmra.mxu0 %v131
  %v244 = vpop.f32.mrf.mxu0
  %v245 = vadd.f32 %v207, %v244
  %246 = vmatmul.f32.gmra.mxu0 %v134
  %v247 = vpop.f32.mrf.mxu0
  %v248 = vadd.f32 %v210, %v247
  %249 = vmatmul.f32.gmra.mxu0 %v137
  %v250 = vpop.f32.mrf.mxu0
  %v251 = vadd.f32 %v213, %v250
  %252 = vmatmul.f32.gmra.mxu0 %v140
  %v253 = vpop.f32.mrf.mxu0
  %v254 = vadd.f32 %v216, %v253
  %255 = vmatmul.f32.gmra.mxu0 %v143
  %v256 = vpop.f32.mrf.mxu0
  %v257 = vadd.f32 %v219, %v256
  %258 = vdwg.mxu0
  %v259 = vmax.f32 %v239, 0.0
  %v260 = vmax.f32 %v242, 0.0
  %v261 = vmax.f32 %v245, 0.0
  %v262 = vmax.f32 %v248, 0.0
  %v263 = vmax.f32 %v251, 0.0
  %v264 = vmax.f32 %v254, 0.0
  %v265 = vmax.f32 %v257, 0.0
  %v266 = vld [vmem:[%s3] sm:$0xff]
  %v267 = vld [vmem:[%s3 + $0x8] sm:$0x3]
  %v268 = vld [vmem:[%s4] sm:$0xff]
  %v269 = vld [vmem:[%s4 + $0x8] sm:$0x3]
  %271 = vset.pattern.permute.xlu0 0
  %272 = vperm.xlu0 %271, %v268
  %v273 = vpop.permute.xlu0 %272
  %276 = vset.pattern.permute.xlu0 0
  %277 = vperm.xlu0 %276, %v269
  %v278 = vpop.permute.xlu0 %277
  %vm280 = vcmask 408576
  %v282 = vsel %vm280, %v266, 0
  %v285 = vsel %vm280, %v267, 0
  %vm287 = vcmask 1041408
  %v289 = vsel %vm287, %v265, 0
  %291 = vmatpush.msra.mxu0 0.0
  %292 = vmatpush.msra.mxu0 0.0
  %293 = vmatpush.msra.mxu0 0.0
  %294 = vmatpush.msra.mxu0 0.0
  %295 = vmatpush.msra.mxu0 0.0
  %296 = vmatpush.msra.mxu0 0.0
  %297 = vmatpush.msra.mxu0 0.0
  %298 = vmatpush.msra.mxu0 0.0
  %299 = vmatpush.msra.mxu0 0.0
  %300 = vmatpush.msra.mxu0 %v289
  %301 = vmatpush.msra.mxu0 %v264
  %302 = vmatpush.msra.mxu0 %v263
  %303 = vmatpush.msra.mxu0 %v262
  %304 = vmatpush.msra.mxu0 %v261
  %305 = vmatpush.msra.mxu0 %v260
  %306 = vmatpush.msra.mxu0 %v259
  %307 = vmatmul.f32.gmra.mxu0 %v282
  %v308 = vpop.f32.mrf.mxu0
  %v309 = vadd.f32 %v273, %v308
  %310 = vmatmul.f32.gmra.mxu0 %v285
  %v311 = vpop.f32.mrf.mxu0
  %v312 = vadd.f32 %v278, %v311
  %313 = vdwg.mxu0
  %vm314 = vcmask 31744
  %v315 = vsel %vm314, %v309, -inf
  %vm316 = vcmask 25600
  %v317 = vsel %vm316, %v312, -inf
  %v318 = vmax.f32 %v315, %v317
  %v319 = vrot.slane %v318, 4
  %v320 = vmax.f32 %v318, %v319
  %v321 = vrot.slane %v320, 2
  %v322 = vmax.f32 %v320, %v321
  %v323 = vrot.slane %v322, 1
  %v324 = vmax.f32 %v322, %v323
  %v325 = vsub.f32 %v309, %v324
  %v326 = vsub.f32 %v312, %v324
  %v327 = vmul.f32 %v325, 1.442695
  %v328 = vpow.pop %v327
  %v329 = vmul.f32 %v326, 1.442695
  %v330 = vpow.pop %v329
  %v331 = vsel %vm314, %v328, 0.0
  %v332 = vsel %vm316, %v330, 0.0
  %v333 = vadd.f32 %v331, %v332
  %v334 = vrot.slane %v333, 4
  %v335 = vadd.f32 %v333, %v334
  %v336 = vrot.slane %v335, 2
  %v337 = vadd.f32 %v335, %v336
  %v338 = vrot.slane %v337, 1
  %v339 = vadd.f32 %v337, %v338
  %v340 = vlog2.pop %v339
  %v341 = vmul.f32 %v340, 0.6931472
  %v342 = vadd.f32 %v341, %v324
  %v343 = vsub.f32 %v309, %v342
  %v344 = vsub.f32 %v312, %v342
  %345 = vst.msk [vmem:[%s5] sm:$0xff] %vm314, %v343
  %346 = vst.msk [vmem:[%s5 + $0x8] sm:$0x3] %vm316, %v344
  // Predicated region
  $region22: #{net_forward.5} parent=0 // pred_check
    _
  $region23: #{net_forward.5} parent=0 // pred_check_branch
    %348 = sbr.rel (0) target = $region25
  $region24: #{net_forward.5} parent=0 // pred_region
    _
  $region25: #{net_forward.5} parent=0 // pred_fallthru
    _
  // Predicated region
  $region26: #{net_forward.5} parent=0 // pred_check
    _
  $region27: #{net_forward.5} parent=0 // pred_check_branch
    %350 = sbr.rel (0) target = $region29
  $region28: #{net_forward.5} parent=0 // pred_region
    _
  $region29: #{net_forward.5} parent=0 // pred_fallthru
    _

</llo_original>
